<compile_context>
chip_gen: v7x
topology: tpu7x:2x2x1
jax: 0.10.0
libtpu: 0.0.40
codegen_flags: <defaults>
</compile_context>

<pallas_src>
import jax
import jax.numpy as jnp
from jax import lax
from jax.experimental import pallas as pl
from jax.experimental.pallas import tpu as pltpu


def _round_up(x, m):
    return (x + m - 1) // m * m


# --------------------------------- kernel -----------------------------------
def _safa_branch_kernel(f_ref, w1_ref, b1_ref, w2_ref, b2_ref, out_ref):
    """One batch block (Bt examples) per grid step.

    f_ref  : (Bt, C, N)            feature block, source dtype (f32 or bf16)
    w1_ref : (N, NUM*HID_pad)      SA first projection, head-major 128-aligned
    b1_ref : (1, NUM*HID_pad)      f32 (padded tail columns are zero)
    w2_ref : (NUM, HID_pad, N)     SA second projection (zero-padded K rows)
    b2_ref : (NUM, N)              f32
    out_ref: (Bt, NUM, C)          L2-normalized output, C on lanes, f32
    """
    bt = f_ref.shape[0]
    num, hid_pad, n = w2_ref.shape
    cdt = w1_ref.dtype                                       # compute dtype

    fsrc = f_ref[...]                                        # (Bt, C, N)

    # mask, _ = x.max(1): channel-wise max over the (unpadded) real channels.
    m = jnp.max(fsrc, axis=1)                                # (Bt, N)
    f = fsrc.astype(cdt)                                     # MXU operand copy

    # einsum('bi,ijd->bjd', mask, w1) + b1 as ONE wide matmul; columns are
    # head-major with a 128-aligned HID_pad stride per head.
    h = jnp.dot(m.astype(cdt), w1_ref[...],
                preferred_element_type=jnp.float32)
    h = h + b1_ref[...]                                      # (Bt, NUM*HID_pad) f32

    # einsum('bjd,jid->bid', h, w2) + b2 as one head-batched matmul.
    # HID_pad is a multiple of 128 -> the reshape is lane-aligned; padded K
    # rows of w2 are zero, so the result is exact.
    h3 = h.reshape(bt, num, hid_pad).astype(cdt)             # (Bt, NUM, HID_pad)
    h3 = jnp.swapaxes(h3, 0, 1)                              # (NUM, Bt, HID_pad)
    mask_t = lax.dot_general(
        h3, w2_ref[...],
        dimension_numbers=(((2,), (1,)), ((0,), (0,))),
        preferred_element_type=jnp.float32)                  # (NUM, Bt, N)
    mask_t = mask_t + b2_ref[...].reshape(num, 1, n)         # f32 bias
    mask = jnp.swapaxes(mask_t.astype(cdt), 0, 1)            # (Bt, NUM, N)

    # torch.matmul(f, w): out[b, d, c] = sum_i mask[b, d, i] * f[b, c, i]
    # (C on lanes -> lane-dense output at real SAFA sizes).
    out = lax.dot_general(
        mask, f,
        dimension_numbers=(((2,), (2,)), ((0,), (0,))),
        preferred_element_type=jnp.float32)                  # (Bt, NUM, C)

    # F.normalize(out.view(B, -1), p=2, dim=1): Frobenius norm over the whole
    # (NUM, C) slab, per batch row.
    ssq = jnp.sum(out * out, axis=(1, 2), keepdims=True)     # (Bt, 1, 1)
    out_ref[...] = out * lax.rsqrt(jnp.maximum(ssq, 1e-24))


# ------------------------------- wrappers ------------------------------------
def prepare_sa_params(w1, b1, w2, b2, *, compute_dtype=jnp.bfloat16):
    """One-time re-layout of SA parameters into the kernel's layout.

    w1: (N, HID, NUM)  b1: (1, HID, NUM)  w2: (HID, N, NUM)  b2: (1, N, NUM)
    HID is zero-padded to a multiple of 128 per head so in-kernel per-head
    views of the hidden activation are lane-aligned.  Done once at init time.
    """
    n, hid, num = w1.shape
    hid_pad = _round_up(hid, 128)

    # first projection: (N, NUM, HID_pad) head-major -> (N, NUM*HID_pad)
    w1k = jnp.transpose(w1, (0, 2, 1))                        # (N, NUM, HID)
    w1k = jnp.pad(w1k, ((0, 0), (0, 0), (0, hid_pad - hid)))
    w1k = w1k.reshape(n, num * hid_pad).astype(compute_dtype)
    b1k = jnp.transpose(b1[0], (1, 0))                        # (NUM, HID)
    b1k = jnp.pad(b1k, ((0, 0), (0, hid_pad - hid)))
    b1k = b1k.reshape(1, num * hid_pad).astype(jnp.float32)

    # second projection: head-leading, zero-padded contraction rows
    w2k = jnp.transpose(w2, (2, 0, 1))                        # (NUM, HID, N)
    w2k = jnp.pad(w2k, ((0, 0), (0, hid_pad - hid), (0, 0))).astype(compute_dtype)
    b2k = jnp.transpose(b2[0], (1, 0)).astype(jnp.float32)    # (NUM, N)
    return w1k, b1k, w2k, b2k


def safa_branch(f, params_k, *, block_b=8, vmem_limit_bytes=None):
    """One SAFA branch: SA(f) -> matmul -> flatten -> L2 normalize.

    f        : (B, C, N)  (f32 or bf16, passed through un-padded / un-cast)
    params_k : output of prepare_sa_params
    returns    (B, C * NUM) float32
    """
    w1k, b1k, w2k, b2k = params_k
    B, C, N = f.shape
    num, hid_pad, n_w = w2k.shape
    assert n_w == N and w1k.shape[0] == N, "params were prepared for a different N"

    # >=2 grid steps on the parallel batch axis (keeps both v7x TCs busy);
    # raise block_b on v6e/v7x when B is large to amortize per-step overhead.
    bt = max(1, min(block_b, pl.cdiv(B, 2)))
    grid = (pl.cdiv(B, bt),)

    w_bytes = sum(int(x.size) * x.dtype.itemsize for x in (w1k, b1k, w2k, b2k))
    if vmem_limit_bytes is None:
        f_blk = bt * C * N * f.dtype.itemsize
        out_blk = bt * num * C * 4
        interm = 3 * bt * num * (N + hid_pad) * 4
        est = 4 * f_blk + 2 * w_bytes + 2 * out_blk + interm + (8 << 20)
        vmem_limit_bytes = int(min(64 << 20, max(32 << 20, est)))

    cost = pl.CostEstimate(
        flops=2 * B * (N * num * hid_pad + num * hid_pad * N + num * N * C),
        transcendentals=B,
        bytes_accessed=int(B * C * N * f.dtype.itemsize) + w_bytes
        + B * num * C * 4,
    )

    out = pl.pallas_call(
        _safa_branch_kernel,
        out_shape=jax.ShapeDtypeStruct((B, num, C), jnp.float32),
        grid=grid,
        in_specs=[
            # last two block dims == full (C, N) extents -> no padding needed
            pl.BlockSpec((bt, C, N), lambda b: (b, 0, 0)),
            pl.BlockSpec((N, num * hid_pad), lambda b: (0, 0)),
            pl.BlockSpec((1, num * hid_pad), lambda b: (0, 0)),
            pl.BlockSpec((num, hid_pad, N), lambda b: (0, 0, 0)),
            pl.BlockSpec((num, N), lambda b: (0, 0)),
        ],
        out_specs=pl.BlockSpec((bt, num, C), lambda b: (b, 0, 0)),
        compiler_params=pltpu.CompilerParams(
            dimension_semantics=("parallel",),
            vmem_limit_bytes=vmem_limit_bytes),
        cost_estimate=cost,
    )(f, w1k, b1k, w2k, b2k)

    # (B, NUM, C) -> (B, C*NUM) in torch's (C-major, head-minor) order.
    # Tiny output-layout plumbing; negligible next to the f stream.
    return jnp.transpose(out, (0, 2, 1)).reshape(B, C * num)


def init_sa_params(key, in_dim, num):
    """Mirrors SA.init_weights_: normal(0, 0.005) weights, 0.1 biases."""
    hid = in_dim // 2
    k1, k2 = jax.random.split(key)
    w1 = 0.005 * jax.random.normal(k1, (in_dim, hid, num), jnp.float32)
    b1 = jnp.full((1, hid, num), 0.1, jnp.float32)
    w2 = 0.005 * jax.random.normal(k2, (hid, in_dim, num), jnp.float32)
    b2 = jnp.full((1, in_dim, num), 0.1, jnp.float32)
    return (w1, b1, w2, b2)


def safa_forward(res2_feat, res1, sa1_kparams, sa2_kparams, *, block_b=8):
    """SAFA.forward with the backbone factored out (see TODO above)."""
    B, C = res1.shape[:2]
    f1 = res1.reshape(B, C, -1)
    f2 = res2_feat.reshape(B, C, -1)
    o1 = safa_branch(f1, sa1_kparams, block_b=block_b)
    o2 = safa_branch(f2, sa2_kparams, block_b=block_b)
    return o1, o2


# ----------------------------- pure-JAX reference ---------------------------
def _sa_ref(x, w1, b1, w2, b2):
    m = jnp.max(x, axis=1)                                    # (B, N)
    h = jnp.einsum('bi,ijd->bjd', m, w1) + b1
    return jnp.einsum('bjd,jid->bid', h, w2) + b2             # (B, N, NUM)


def _branch_ref(f, w1, b1, w2, b2):
    mask = _sa_ref(f, w1, b1, w2, b2)
    o = jnp.einsum('bcn,bnd->bcd', f, mask).reshape(f.shape[0], -1)
    nrm = jnp.maximum(jnp.linalg.norm(o, axis=1, keepdims=True), 1e-12)
    return o / nrm


if __name__ == "__main__":
    key = jax.random.PRNGKey(0)
    k_res1, k_res2, k_sa1, k_sa2 = jax.random.split(key, 4)

    B, C = 2, 4
    H1, W1 = 8, 8      # -> in_dim1 = 64
    H2, W2 = 8, 16     # -> in_dim2 = 128
    NUM = 8

    res1 = jax.random.normal(k_res1, (B, C, H1, W1), jnp.float32)
    res2_feat = jax.random.normal(k_res2, (B, C, H2, W2), jnp.float32)

    sa1_raw = init_sa_params(k_sa1, H1 * W1, NUM)
    sa2_raw = init_sa_params(k_sa2, H2 * W2, NUM)

    # One-time weight re-layout (not per call).  Default path: bf16 weights /
    # MXU operands with f32 accumulation, f32 bias adds, f32 norm.
    sa1_bf16 = prepare_sa_params(*sa1_raw, compute_dtype=jnp.bfloat16)
    sa2_bf16 = prepare_sa_params(*sa2_raw, compute_dtype=jnp.bfloat16)
    o1, o2 = safa_forward(res2_feat, res1, sa1_bf16, sa2_bf16)
    o1, o2 = jax.block_until_ready((o1, o2))

    # f32 path through the same kernel for a tight correctness check.
    sa1_f32 = prepare_sa_params(*sa1_raw, compute_dtype=jnp.float32)
    sa2_f32 = prepare_sa_params(*sa2_raw, compute_dtype=jnp.float32)
    o1_f, o2_f = safa_forward(res2_feat, res1, sa1_f32, sa2_f32)
    o1_f, o2_f = jax.block_until_ready((o1_f, o2_f))

    r1 = _branch_ref(res1.reshape(B, C, -1), *sa1_raw)
    r2 = _branch_ref(res2_feat.reshape(B, C, -1), *sa2_raw)

    assert o1.shape == (B, C * NUM) and o2.shape == (B, C * NUM)
    assert jnp.allclose(o1_f, r1, rtol=1e-5, atol=1e-5)
    assert jnp.allclose(o2_f, r2, rtol=1e-5, atol=1e-5)
    assert jnp.allclose(o1, r1, rtol=5e-2, atol=2e-2)   # bf16-MXU path
    assert jnp.allclose(o2, r2, rtol=5e-2, atol=2e-2)

    print("KERNEL_OK")
</pallas_src>

<mosaic_0001>
module attributes {stable_mosaic.version = 11 : i64} {
  func.func @_safa_branch_kernel(%arg0: i32, %arg1: memref<1x4x64xf32, #tpu.memory_space<vmem>>, %arg2: memref<64x1024xbf16, #tpu.memory_space<vmem>>, %arg3: memref<1x1024xf32, #tpu.memory_space<vmem>>, %arg4: memref<8x128x64xbf16, #tpu.memory_space<vmem>>, %arg5: memref<8x64xf32, #tpu.memory_space<vmem>>, %arg6: memref<1x8x4xf32, #tpu.memory_space<vmem>>) attributes {dimension_semantics = [#tpu.dimension_semantics<parallel>], iteration_bounds = array<i64: 2>, scalar_prefetch = 0 : i64, scratch_operands = 0 : i64, tpu.core_type = #tpu.core_type<tc>, window_params = [{transform_indices = @transform_0, window_bounds = array<i64: 1, 4, 64>}, {pipeline_mode = #tpu.pipeline_mode<synchronous>, transform_indices = @transform_1, window_bounds = array<i64: 64, 1024>}, {pipeline_mode = #tpu.pipeline_mode<synchronous>, transform_indices = @transform_2, window_bounds = array<i64: 1, 1024>}, {pipeline_mode = #tpu.pipeline_mode<synchronous>, transform_indices = @transform_3, window_bounds = array<i64: 8, 128, 64>}, {pipeline_mode = #tpu.pipeline_mode<synchronous>, transform_indices = @transform_4, window_bounds = array<i64: 8, 64>}, {transform_indices = @transform_5, window_bounds = array<i64: 1, 8, 4>}]} {
    %c0 = arith.constant 0 : index
    %c0_0 = arith.constant 0 : index
    %c0_1 = arith.constant 0 : index
    %0 = vector.load %arg1[%c0, %c0_0, %c0_1] : memref<1x4x64xf32, #tpu.memory_space<vmem>>, vector<1x4x64xf32>
    %cst = arith.constant dense<0xFF800000> : vector<1x64xf32>
    %1 = vector.multi_reduction <maximumf>, %0, %cst [1] : vector<1x4x64xf32> to vector<1x64xf32>
    %2 = arith.truncf %0 : vector<1x4x64xf32> to vector<1x4x64xbf16>
    %3 = arith.truncf %1 : vector<1x64xf32> to vector<1x64xbf16>
    %c0_2 = arith.constant 0 : index
    %c0_3 = arith.constant 0 : index
    %4 = vector.load %arg2[%c0_2, %c0_3] : memref<64x1024xbf16, #tpu.memory_space<vmem>>, vector<64x1024xbf16>
    %cst_4 = arith.constant dense<0.000000e+00> : vector<1x1024xf32>
    %5 = tpu.matmul %3, %4, %cst_4 {dimension_numbers = #tpu.dot_dimension_numbers<[1], [0], [0], [1], [0, 0, 1, 1], [], []>} : vector<1x64xbf16>, vector<64x1024xbf16>, vector<1x1024xf32> -> vector<1x1024xf32>
    %c0_5 = arith.constant 0 : index
    %c0_6 = arith.constant 0 : index
    %6 = vector.load %arg3[%c0_5, %c0_6] : memref<1x1024xf32, #tpu.memory_space<vmem>>, vector<1x1024xf32>
    %7 = arith.addf %5, %6 : vector<1x1024xf32>
    %8 = vector.shape_cast %7 : vector<1x1024xf32> to vector<1x8x128xf32>
    %9 = arith.truncf %8 : vector<1x8x128xf32> to vector<1x8x128xbf16>
    %10 = tpu.transpose %9, [1, 0, 2] : vector<1x8x128xbf16> -> vector<8x1x128xbf16>
    %c0_7 = arith.constant 0 : index
    %c0_8 = arith.constant 0 : index
    %c0_9 = arith.constant 0 : index
    %11 = vector.load %arg4[%c0_7, %c0_8, %c0_9] : memref<8x128x64xbf16, #tpu.memory_space<vmem>>, vector<8x128x64xbf16>
    %cst_10 = arith.constant dense<0.000000e+00> : vector<8x1x64xf32>
    %12 = tpu.matmul %10, %11, %cst_10 {dimension_numbers = #tpu.dot_dimension_numbers<[2], [1], [1], [2], [0, 0, 0, 1, 1, 2], [0], [0]>} : vector<8x1x128xbf16>, vector<8x128x64xbf16>, vector<8x1x64xf32> -> vector<8x1x64xf32>
    %c0_11 = arith.constant 0 : index
    %c0_12 = arith.constant 0 : index
    %13 = vector.load %arg5[%c0_11, %c0_12] : memref<8x64xf32, #tpu.memory_space<vmem>>, vector<8x64xf32>
    %14 = vector.shape_cast %13 : vector<8x64xf32> to vector<8x1x64xf32>
    %15 = arith.addf %12, %14 : vector<8x1x64xf32>
    %16 = arith.truncf %15 : vector<8x1x64xf32> to vector<8x1x64xbf16>
    %17 = tpu.transpose %16, [1, 0, 2] : vector<8x1x64xbf16> -> vector<1x8x64xbf16>
    %cst_13 = arith.constant dense<0.000000e+00> : vector<1x8x4xf32>
    %18 = tpu.matmul %17, %2, %cst_13 {dimension_numbers = #tpu.dot_dimension_numbers<[2], [2], [1], [1], [0, 0, 0, 1, 1, 1], [0], [0]>} : vector<1x8x64xbf16>, vector<1x4x64xbf16>, vector<1x8x4xf32> -> vector<1x8x4xf32>
    %19 = arith.mulf %18, %18 : vector<1x8x4xf32>
    %cst_14 = arith.constant dense<0.000000e+00> : vector<1xf32>
    %20 = vector.multi_reduction <add>, %19, %cst_14 [1, 2] : vector<1x8x4xf32> to vector<1xf32>
    %21 = vector.shape_cast %20 : vector<1xf32> to vector<1x1x1xf32>
    %cst_15 = arith.constant 1.000000e-24 : f32
    %22 = vector.broadcast %cst_15 : f32 to vector<1x1x1xf32>
    %23 = arith.maximumf %21, %22 : vector<1x1x1xf32>
    %24 = math.rsqrt %23 : vector<1x1x1xf32>
    %25 = vector.broadcast %24 : vector<1x1x1xf32> to vector<1x8x4xf32>
    %26 = arith.mulf %18, %25 : vector<1x8x4xf32>
    %c0_16 = arith.constant 0 : index
    %c0_17 = arith.constant 0 : index
    %c0_18 = arith.constant 0 : index
    %27 = vector.load %arg6[%c0_16, %c0_17, %c0_18] : memref<1x8x4xf32, #tpu.memory_space<vmem>>, vector<1x8x4xf32>
    tpu.vector_store %arg6[%c0_16, %c0_17, %c0_18], %26 {strides = array<i32>} : memref<1x8x4xf32, #tpu.memory_space<vmem>>, vector<1x8x4xf32>,
    return
  }
  func.func @transform_0(%arg0: i32) -> (i32, i32, i32) {
    %c0_i32 = arith.constant 0 : i32
    %c0_i32_0 = arith.constant 0 : i32
    %c0_i32_1 = arith.constant 0 : i32
    return %arg0, %c0_i32, %c0_i32_0 : i32, i32, i32
  }
  func.func @transform_1(%arg0: i32) -> (i32, i32) {
    %c0_i32 = arith.constant 0 : i32
    %c0_i32_0 = arith.constant 0 : i32
    %c0_i32_1 = arith.constant 0 : i32
    return %c0_i32, %c0_i32_0 : i32, i32
  }
  func.func @transform_2(%arg0: i32) -> (i32, i32) {
    %c0_i32 = arith.constant 0 : i32
    %c0_i32_0 = arith.constant 0 : i32
    %c0_i32_1 = arith.constant 0 : i32
    return %c0_i32, %c0_i32_0 : i32, i32
  }
  func.func @transform_3(%arg0: i32) -> (i32, i32, i32) {
    %c0_i32 = arith.constant 0 : i32
    %c0_i32_0 = arith.constant 0 : i32
    %c0_i32_1 = arith.constant 0 : i32
    %c0_i32_2 = arith.constant 0 : i32
    return %c0_i32, %c0_i32_0, %c0_i32_1 : i32, i32, i32
  }
  func.func @transform_4(%arg0: i32) -> (i32, i32) {
    %c0_i32 = arith.constant 0 : i32
    %c0_i32_0 = arith.constant 0 : i32
    %c0_i32_1 = arith.constant 0 : i32
    return %c0_i32, %c0_i32_0 : i32, i32
  }
  func.func @transform_5(%arg0: i32) -> (i32, i32, i32) {
    %c0_i32 = arith.constant 0 : i32
    %c0_i32_0 = arith.constant 0 : i32
    %c0_i32_1 = arith.constant 0 : i32
    return %arg0, %c0_i32, %c0_i32_0 : i32, i32, i32
  }
}

</mosaic_0001>

<llo_original>
// kernel: tpu_custom_call.1
$region0: #{tpu_custom_call.1}
  #allocation0 [shape = 'u32[]', space=smem, size = 0x4, offset = 0x4, fixed_abs, tag = 'smem constant byte address 0x4 - core index']
  #allocation1 [shape = 'u32[144,128]{1,0:T(1,128)}', space=vmem, size = 0x12000, scoped, tag = 'internal scratch']
  %s0 = inlined_call_operand.vmem [shape: f32[2,4,64], index: 0, kind: input, shape index: {}]
  %s1 = inlined_call_operand.vmem [shape: bf16[64,1024], index: 1, kind: input, shape index: {}]
  %s2 = inlined_call_operand.vmem [shape: f32[1,1024], index: 2, kind: input, shape index: {}]
  %s3 = inlined_call_operand.vmem [shape: bf16[8,128,64], index: 3, kind: input, shape index: {}]
  %s4 = inlined_call_operand.vmem [shape: f32[8,64], index: 4, kind: input, shape index: {}]
  %s5 = inlined_call_operand.vmem [shape: f32[2,8,4], index: 5, kind: output, shape index: {}]
  %s6 = sld [smem:[#allocation0]]
  $region53: #{tpu_custom_call.1} parent=0
    _
  %s8 = ssub.s32 1, %s6
  %s9 = scalar_select 0, %s8, %s6
  loop: start=0, step=1, limit=4
  $region2: #{tpu_custom_call.1} parent=0 // loop_pre_header
    _
  $region3: #{tpu_custom_call.1} parent=0 // loop_header
    %s11 = sphi 0, %s15
    %p12 = scmp.ge.s32.totalorder %s11, 4
    %s21 = sphi 0, %s23
    %s24 = sphi 0, %s21
    %s25 = sphi 0, %s24
    %s41 = sphi 0, %s25
    %s45 = sphi 0, %s45
    %s47 = sphi 0, %s45
    %s48 = sphi 0, %s47
    %s62 = sphi 0, %s48
    %s66 = sphi 0, %s66
    %s68 = sphi 0, %s66
    %s69 = sphi 0, %s68
    %s83 = sphi 0, %s69
    %s87 = sphi 0, %s87
    %s89 = sphi 0, %s87
    %s90 = sphi 0, %s89
    %s104 = sphi 0, %s90
    %s108 = sphi 0, %s108
    %s110 = sphi 0, %s108
    %s111 = sphi 0, %s110
    %s125 = sphi 0, %s111
    %s131 = sphi 0, %s133
    %s134 = sphi 0, %s131
    %s135 = sphi 0, %s134
    %s151 = sphi 0, %s135
  $region4: #{tpu_custom_call.1} parent=0 // loop_header_branch
    %14 = sbr.rel (%p12) target = $region8
  $region5: #{tpu_custom_call.1} parent=0 // loop_body
    %s16 = ssub.s32 %s11, 1
    %s17 = ssub.s32 %s11, 2
    %s18 = sadd.s32 %s11, 1
    %s19 = ssub.s32 %s11, %s18
    %p20 = scmp.eq.s32.totalorder %s19, 0
    %s22 = sadd.s32 %s21, 1
    %s23 = scalar_select %p20, %s21, %s22
    %p26 = pneg %p20
    %p27 = scmp.eq.s32.totalorder %s11, 1
    %p28 = por %p26, %p27
    %p29 = scmp.ne.s32.totalorder %s21, %s24
    %p30 = scmp.eq.s32.totalorder %s11, 0
    %p31 = por %p29, %p30
    %p32 = scmp.ne.s32.totalorder %s21, %s24
    %p33 = scmp.eq.s32.totalorder %s16, 1
    %p34 = por %p32, %p33
    %p35 = scmp.ne.s32.totalorder %s24, %s25
    %p36 = scmp.eq.s32.totalorder %s16, 0
    %p37 = por %p35, %p36
    %p38 = scmp.ne.s32.totalorder %s24, %s25
    %p39 = scmp.eq.s32.totalorder %s17, 1
    %p40 = por %p38, %p39
    %p42 = scmp.ne.s32.totalorder %s25, %s41
    %p43 = scmp.eq.s32.totalorder %s17, 0
    %p44 = por %p42, %p43
    %s46 = sadd.s32 %s45, 1
    %p49 = scmp.eq.s32.totalorder %s11, 1
    %p50 = scmp.ne.s32.totalorder %s45, %s47
    %p51 = scmp.eq.s32.totalorder %s11, 0
    %p52 = por %p50, %p51
    %p53 = scmp.ne.s32.totalorder %s45, %s47
    %p54 = scmp.eq.s32.totalorder %s16, 1
    %p55 = por %p53, %p54
    %p56 = scmp.ne.s32.totalorder %s47, %s48
    %p57 = scmp.eq.s32.totalorder %s16, 0
    %p58 = por %p56, %p57
    %p59 = scmp.ne.s32.totalorder %s47, %s48
    %p60 = scmp.eq.s32.totalorder %s17, 1
    %p61 = por %p59, %p60
    %p63 = scmp.ne.s32.totalorder %s48, %s62
    %p64 = scmp.eq.s32.totalorder %s17, 0
    %p65 = por %p63, %p64
    %s67 = sadd.s32 %s66, 1
    %p70 = scmp.eq.s32.totalorder %s11, 1
    %p71 = scmp.ne.s32.totalorder %s66, %s68
    %p72 = scmp.eq.s32.totalorder %s11, 0
    %p73 = por %p71, %p72
    %p74 = scmp.ne.s32.totalorder %s66, %s68
    %p75 = scmp.eq.s32.totalorder %s16, 1
    %p76 = por %p74, %p75
    %p77 = scmp.ne.s32.totalorder %s68, %s69
    %p78 = scmp.eq.s32.totalorder %s16, 0
    %p79 = por %p77, %p78
    %p80 = scmp.ne.s32.totalorder %s68, %s69
    %p81 = scmp.eq.s32.totalorder %s17, 1
    %p82 = por %p80, %p81
    %p84 = scmp.ne.s32.totalorder %s69, %s83
    %p85 = scmp.eq.s32.totalorder %s17, 0
    %p86 = por %p84, %p85
    %s88 = sadd.s32 %s87, 1
    %p91 = scmp.eq.s32.totalorder %s11, 1
    %p92 = scmp.ne.s32.totalorder %s87, %s89
    %p93 = scmp.eq.s32.totalorder %s11, 0
    %p94 = por %p92, %p93
    %p95 = scmp.ne.s32.totalorder %s87, %s89
    %p96 = scmp.eq.s32.totalorder %s16, 1
    %p97 = por %p95, %p96
    %p98 = scmp.ne.s32.totalorder %s89, %s90
    %p99 = scmp.eq.s32.totalorder %s16, 0
    %p100 = por %p98, %p99
    %p101 = scmp.ne.s32.totalorder %s89, %s90
    %p102 = scmp.eq.s32.totalorder %s17, 1
    %p103 = por %p101, %p102
    %p105 = scmp.ne.s32.totalorder %s90, %s104
    %p106 = scmp.eq.s32.totalorder %s17, 0
    %p107 = por %p105, %p106
    %s109 = sadd.s32 %s108, 1
    %p112 = scmp.eq.s32.totalorder %s11, 1
    %p113 = scmp.ne.s32.totalorder %s108, %s110
    %p114 = scmp.eq.s32.totalorder %s11, 0
    %p115 = por %p113, %p114
    %p116 = scmp.ne.s32.totalorder %s108, %s110
    %p117 = scmp.eq.s32.totalorder %s16, 1
    %p118 = por %p116, %p117
    %p119 = scmp.ne.s32.totalorder %s110, %s111
    %p120 = scmp.eq.s32.totalorder %s16, 0
    %p121 = por %p119, %p120
    %p122 = scmp.ne.s32.totalorder %s110, %s111
    %p123 = scmp.eq.s32.totalorder %s17, 1
    %p124 = por %p122, %p123
    %p126 = scmp.ne.s32.totalorder %s111, %s125
    %p127 = scmp.eq.s32.totalorder %s17, 0
    %p128 = por %p126, %p127
    %s129 = ssub.s32 %s11, %s18
    %p130 = scmp.eq.s32.totalorder %s129, 0
    %s132 = sadd.s32 %s131, 1
    %s133 = scalar_select %p130, %s131, %s132
    %p136 = pneg %p130
    %p137 = scmp.eq.s32.totalorder %s11, 1
    %p138 = por %p136, %p137
    %p139 = scmp.ne.s32.totalorder %s131, %s134
    %p140 = scmp.eq.s32.totalorder %s11, 0
    %p141 = por %p139, %p140
    %p142 = scmp.ne.s32.totalorder %s131, %s134
    %p143 = scmp.eq.s32.totalorder %s16, 1
    %p144 = por %p142, %p143
    %p145 = scmp.ne.s32.totalorder %s134, %s135
    %p146 = scmp.eq.s32.totalorder %s16, 0
    %p147 = por %p145, %p146
    %p148 = scmp.ne.s32.totalorder %s134, %s135
    %p149 = scmp.eq.s32.totalorder %s17, 1
    %p150 = por %p148, %p149
    %p152 = scmp.ne.s32.totalorder %s135, %s151
    %p153 = scmp.eq.s32.totalorder %s17, 0
    %p154 = por %p152, %p153
    %p155 = scmp.le.s32.totalorder 1, %s11
    %p156 = scmp.lt.s32.totalorder %s11, 3
    %p157 = pnand %p155, %p156
    %p158 = pneg %p157
    // Predicated region
    $region9: #{tpu_custom_call.1} parent=5 // pred_check
      _
    $region10: #{tpu_custom_call.1} parent=5 // pred_check_branch
      %160 = sbr.rel (%p157) target = $region12
    $region11: #{tpu_custom_call.1} parent=5 // pred_region
      %s161 = ssub.s32 %s11, 1
      // Predicated region
      $region13: #{tpu_custom_call.1} parent=11 // pred_check
        %p162 = pneg %p58
      $region14: #{tpu_custom_call.1} parent=11 // pred_check_branch
        %164 = sbr.rel (%p162) target = $region16
      $region15: #{tpu_custom_call.1} parent=11 // pred_region
        _
      $region16: #{tpu_custom_call.1} parent=11 // pred_fallthru
        _
      // Predicated region
      $region17: #{tpu_custom_call.1} parent=11 // pred_check
        %p165 = pneg %p79
      $region18: #{tpu_custom_call.1} parent=11 // pred_check_branch
        %167 = sbr.rel (%p165) target = $region20
      $region19: #{tpu_custom_call.1} parent=11 // pred_region
        _
      $region20: #{tpu_custom_call.1} parent=11 // pred_fallthru
        _
      // Predicated region
      $region21: #{tpu_custom_call.1} parent=11 // pred_check
        %p168 = pneg %p100
      $region22: #{tpu_custom_call.1} parent=11 // pred_check_branch
        %170 = sbr.rel (%p168) target = $region24
      $region23: #{tpu_custom_call.1} parent=11 // pred_region
        _
      $region24: #{tpu_custom_call.1} parent=11 // pred_fallthru
        _
      // Predicated region
      $region25: #{tpu_custom_call.1} parent=11 // pred_check
        %p171 = pneg %p121
      $region26: #{tpu_custom_call.1} parent=11 // pred_check_branch
        %173 = sbr.rel (%p171) target = $region28
      $region27: #{tpu_custom_call.1} parent=11 // pred_region
        _
      $region28: #{tpu_custom_call.1} parent=11 // pred_fallthru
        _
    $region12: #{tpu_custom_call.1} parent=5 // pred_fallthru
      _
    %p174 = scmp.lt.s32.totalorder %s11, 2
    // Predicated region
    $region29: #{tpu_custom_call.1} parent=5 // pred_check
      %p175 = pneg %p174
    $region30: #{tpu_custom_call.1} parent=5 // pred_check_branch
      %177 = sbr.rel (%p175) target = $region32
    $region31: #{tpu_custom_call.1} parent=5 // pred_region
      // Predicated region
      $region33: #{tpu_custom_call.1} parent=31 // pred_check
        %p178 = pneg %p31
      $region34: #{tpu_custom_call.1} parent=31 // pred_check_branch
        %180 = sbr.rel (%p178) target = $region36
      $region35: #{tpu_custom_call.1} parent=31 // pred_region
        %p181 = scmp.lt.s32.totalorder %s11, 1
        %s182 = scalar_select %p181, %s11, 1
        %s183 = smul.addr %s182, 4
        %s184 = scalar_lea.vmem %s0, %s183
      $region36: #{tpu_custom_call.1} parent=31 // pred_fallthru
        _
    $region32: #{tpu_custom_call.1} parent=5 // pred_fallthru
      _
    %p185 = scmp.le.s32.totalorder 1, %s11
    %p186 = scmp.lt.s32.totalorder %s11, 3
    %p187 = pnand %p185, %p186
    %p188 = pneg %p187
    // Predicated region
    $region37: #{tpu_custom_call.1} parent=5 // pred_check
      _
    $region38: #{tpu_custom_call.1} parent=5 // pred_check_branch
      %190 = sbr.rel (%p187) target = $region40
    $region39: #{tpu_custom_call.1} parent=5 // pred_region
      %s191 = ssub.s32 %s11, 1
      %p192 = scmp.lt.s32.totalorder %s16, 1
      %s193 = scalar_select %p192, %s16, 1
      %s194 = smul.addr %s193, 4
      %s195 = scalar_lea.vmem %s0, %s194
      %p196 = pneg %p37
      %p197 = pneg %p34
      %p198 = pneg %p58
      %p199 = pneg %p55
      %p200 = pneg %p79
      %p201 = pneg %p76
      %p202 = pneg %p100
      %p203 = pneg %p97
      %p204 = pneg %p121
      %p205 = pneg %p118
      %p206 = pneg %p147
      %p207 = pneg %p144
      %p208 = scmp.lt.s32.totalorder %s16, 1
      %s209 = scalar_select %p208, %s16, 1
      %s210 = smul.addr %s209, 8
      %s211 = scalar_lea.vmem %s5, %s210
      %p212 = scmp.lt.s32.totalorder %s16, 1
      %s213 = scalar_select %p212, %s16, 1
      %s214 = smul.addr %s213, 4
      %s215 = scalar_lea.vmem %s0, %s214
      %p216 = scmp.lt.s32.totalorder %s16, 1
      %s217 = scalar_select %p216, %s16, 1
      %s218 = smul.addr %s217, 8
      %s219 = scalar_lea.vmem %s5, %s218
      %v221 = vld [vmem:[%s215] sm:$0xf]
      %vm222 = vcmask 519168
      %v223 = vsel %vm222, %v221, -inf
      %v224 = vrot.slane %v223, 4
      %v225 = vmax.f32 %v223, %v224
      %v226 = vrot.slane %v225, 2
      %v227 = vmax.f32 %v225, %v226
      %v228 = vrot.slane %v227, 1
      %v229 = vmax.f32 %v227, %v228
      %v230 = vpack.c.bf16 %v221, %v221
      %v231 = vpack.c.bf16 %v229, %v229
      %v232 = vld [vmem:[%s1] sm:$0xff]
      %v233 = vld [vmem:[%s1 + $0x8] sm:$0xff]
      %v234 = vld [vmem:[%s1 + $0x10] sm:$0xff]
      %v235 = vld [vmem:[%s1 + $0x18] sm:$0xff]
      %v236 = vld [vmem:[%s1 + $0x20] sm:$0xff]
      %v237 = vld [vmem:[%s1 + $0x28] sm:$0xff]
      %v238 = vld [vmem:[%s1 + $0x30] sm:$0xff]
      %v239 = vld [vmem:[%s1 + $0x38] sm:$0xff]
      %v240 = vld [vmem:[%s1 + $0x40] sm:$0xff]
      %v241 = vld [vmem:[%s1 + $0x48] sm:$0xff]
      %v242 = vld [vmem:[%s1 + $0x50] sm:$0xff]
      %v243 = vld [vmem:[%s1 + $0x58] sm:$0xff]
      %v244 = vld [vmem:[%s1 + $0x60] sm:$0xff]
      %v245 = vld [vmem:[%s1 + $0x68] sm:$0xff]
      %v246 = vld [vmem:[%s1 + $0x70] sm:$0xff]
      %v247 = vld [vmem:[%s1 + $0x78] sm:$0xff]
      %v248 = vld [vmem:[%s1 + $0x80] sm:$0xff]
      %v249 = vld [vmem:[%s1 + $0x88] sm:$0xff]
      %v250 = vld [vmem:[%s1 + $0x90] sm:$0xff]
      %v251 = vld [vmem:[%s1 + $0x98] sm:$0xff]
      %v252 = vld [vmem:[%s1 + $0xa0] sm:$0xff]
      %v253 = vld [vmem:[%s1 + $0xa8] sm:$0xff]
      %v254 = vld [vmem:[%s1 + $0xb0] sm:$0xff]
      %v255 = vld [vmem:[%s1 + $0xb8] sm:$0xff]
      %v256 = vld [vmem:[%s1 + $0xc0] sm:$0xff]
      %v257 = vld [vmem:[%s1 + $0xc8] sm:$0xff]
      %v258 = vld [vmem:[%s1 + $0xd0] sm:$0xff]
      %v259 = vld [vmem:[%s1 + $0xd8] sm:$0xff]
      %v260 = vld [vmem:[%s1 + $0xe0] sm:$0xff]
      %v261 = vld [vmem:[%s1 + $0xe8] sm:$0xff]
      %v262 = vld [vmem:[%s1 + $0xf0] sm:$0xff]
      %v263 = vld [vmem:[%s1 + $0xf8] sm:$0xff]
      %v264 = vld [vmem:[%s2] sm:$0xff]
      %v297 = vunpack.c.l.b16 %v232
      %v298 = vunpack.c.h.b16 %v232
      %v299 = vunpack.c.l.b16 %v233
      %v300 = vunpack.c.h.b16 %v233
      %v301 = vunpack.c.l.b16 %v234
      %v302 = vunpack.c.h.b16 %v234
      %v303 = vunpack.c.l.b16 %v235
      %v304 = vunpack.c.h.b16 %v235
      %v305 = vunpack.c.l.b16 %v236
      %v306 = vunpack.c.h.b16 %v236
      %v307 = vunpack.c.l.b16 %v237
      %v308 = vunpack.c.h.b16 %v237
      %v309 = vunpack.c.l.b16 %v238
      %v310 = vunpack.c.h.b16 %v238
      %v311 = vunpack.c.l.b16 %v239
      %v312 = vunpack.c.h.b16 %v239
      %v313 = vunpack.c.l.b16 %v240
      %v314 = vunpack.c.h.b16 %v240
      %v315 = vunpack.c.l.b16 %v241
      %v316 = vunpack.c.h.b16 %v241
      %v317 = vunpack.c.l.b16 %v242
      %v318 = vunpack.c.h.b16 %v242
      %v319 = vunpack.c.l.b16 %v243
      %v320 = vunpack.c.h.b16 %v243
      %v321 = vunpack.c.l.b16 %v244
      %v322 = vunpack.c.h.b16 %v244
      %v323 = vunpack.c.l.b16 %v245
      %v324 = vunpack.c.h.b16 %v245
      %v325 = vunpack.c.l.b16 %v246
      %v326 = vunpack.c.h.b16 %v246
      %v327 = vunpack.c.l.b16 %v247
      %v328 = vunpack.c.h.b16 %v247
      %v329 = vunpack.c.l.b16 %v248
      %v330 = vunpack.c.h.b16 %v248
      %v331 = vunpack.c.l.b16 %v249
      %v332 = vunpack.c.h.b16 %v249
      %v333 = vunpack.c.l.b16 %v250
      %v334 = vunpack.c.h.b16 %v250
      %v335 = vunpack.c.l.b16 %v251
      %v336 = vunpack.c.h.b16 %v251
      %v337 = vunpack.c.l.b16 %v252
      %v338 = vunpack.c.h.b16 %v252
      %v339 = vunpack.c.l.b16 %v253
      %v340 = vunpack.c.h.b16 %v253
      %v341 = vunpack.c.l.b16 %v254
      %v342 = vunpack.c.h.b16 %v254
      %v343 = vunpack.c.l.b16 %v255
      %v344 = vunpack.c.h.b16 %v255
      %v345 = vunpack.c.l.b16 %v256
      %v346 = vunpack.c.h.b16 %v256
      %v347 = vunpack.c.l.b16 %v257
      %v348 = vunpack.c.h.b16 %v257
      %v349 = vunpack.c.l.b16 %v258
      %v350 = vunpack.c.h.b16 %v258
      %v351 = vunpack.c.l.b16 %v259
      %v352 = vunpack.c.h.b16 %v259
      %v353 = vunpack.c.l.b16 %v260
      %v354 = vunpack.c.h.b16 %v260
      %v355 = vunpack.c.l.b16 %v261
      %v356 = vunpack.c.h.b16 %v261
      %v357 = vunpack.c.l.b16 %v262
      %v358 = vunpack.c.h.b16 %v262
      %v359 = vunpack.c.l.b16 %v263
      %v360 = vunpack.c.h.b16 %v263
      %v361 = vpack.c.b16 %v305, %v297
      %v362 = vpack.c.b16 %v306, %v298
      %v363 = vpack.c.b16 %v307, %v299
      %v364 = vpack.c.b16 %v308, %v300
      %v365 = vpack.c.b16 %v309, %v301
      %v366 = vpack.c.b16 %v310, %v302
      %v367 = vpack.c.b16 %v311, %v303
      %v368 = vpack.c.b16 %v312, %v304
      %v369 = vpack.c.b16 %v321, %v313
      %v370 = vpack.c.b16 %v322, %v314
      %v371 = vpack.c.b16 %v323, %v315
      %v372 = vpack.c.b16 %v324, %v316
      %v373 = vpack.c.b16 %v325, %v317
      %v374 = vpack.c.b16 %v326, %v318
      %v375 = vpack.c.b16 %v327, %v319
      %v376 = vpack.c.b16 %v328, %v320
      %v377 = vpack.c.b16 %v337, %v329
      %v378 = vpack.c.b16 %v338, %v330
      %v379 = vpack.c.b16 %v339, %v331
      %v380 = vpack.c.b16 %v340, %v332
      %v381 = vpack.c.b16 %v341, %v333
      %v382 = vpack.c.b16 %v342, %v334
      %v383 = vpack.c.b16 %v343, %v335
      %v384 = vpack.c.b16 %v344, %v336
      %v385 = vpack.c.b16 %v353, %v345
      %v386 = vpack.c.b16 %v354, %v346
      %v387 = vpack.c.b16 %v355, %v347
      %v388 = vpack.c.b16 %v356, %v348
      %v389 = vpack.c.b16 %v357, %v349
      %v390 = vpack.c.b16 %v358, %v350
      %v391 = vpack.c.b16 %v359, %v351
      %v392 = vpack.c.b16 %v360, %v352
      %v426 = vlaneseq
      %v427 = vshrl.u32 %v426, 7
      %v428 = vsub.s32 0, %v427
      %v429 = vrot.slane %v264, %v428
      %v430 = vlaneseq
      %v431 = vshrl.u32 %v430, 7
      %v432 = vsub.s32 1, %v431
      %v433 = vrot.slane %v264, %v432
      %v434 = vlaneseq
      %v435 = vshrl.u32 %v434, 7
      %v436 = vsub.s32 2, %v435
      %v437 = vrot.slane %v264, %v436
      %v438 = vlaneseq
      %v439 = vshrl.u32 %v438, 7
      %v440 = vsub.s32 3, %v439
      %v441 = vrot.slane %v264, %v440
      %v442 = vlaneseq
      %v443 = vshrl.u32 %v442, 7
      %v444 = vsub.s32 4, %v443
      %v445 = vrot.slane %v264, %v444
      %v446 = vlaneseq
      %v447 = vshrl.u32 %v446, 7
      %v448 = vsub.s32 5, %v447
      %v449 = vrot.slane %v264, %v448
      %v450 = vlaneseq
      %v451 = vshrl.u32 %v450, 7
      %v452 = vsub.s32 6, %v451
      %v453 = vrot.slane %v264, %v452
      %v454 = vlaneseq
      %v455 = vshrl.u32 %v454, 7
      %v456 = vsub.s32 7, %v455
      %v457 = vrot.slane %v264, %v456
      %vm466 = vcmask 523264
      %v468 = vsel %vm466, %v231, 0
      %470 = vmatprep.subr.bf16.mxu0 %v362
      %471 = vmatpush1.bf16.msra.mxu0 %v361
      %472 = vmatprep.subr.bf16.mxu0 %v370
      %473 = vmatpush1.bf16.msra.mxu0 %v369
      %474 = vmatprep.subr.bf16.mxu0 %v378
      %475 = vmatpush1.bf16.msra.mxu0 %v377
      %476 = vmatprep.subr.bf16.mxu0 %v386
      %477 = vmatpush1.bf16.msra.mxu0 %v385
      %478 = vmatprep.subr.bf16.mxu0 0
      %479 = vmatpush1.bf16.msra.mxu0 0
      %480 = vmatprep.subr.bf16.mxu0 0
      %481 = vmatpush1.bf16.msra.mxu0 0
      %482 = vmatprep.subr.bf16.mxu0 0
      %483 = vmatpush1.bf16.msra.mxu0 0
      %484 = vmatprep.subr.bf16.mxu0 0
      %485 = vmatpush1.bf16.msra.mxu0 0
      %486 = vmatprep.subr.bf16.mxu0 0
      %487 = vmatpush1.bf16.msra.mxu0 0
      %488 = vmatprep.subr.bf16.mxu0 0
      %489 = vmatpush1.bf16.msra.mxu0 0
      %490 = vmatprep.subr.bf16.mxu0 0
      %491 = vmatpush1.bf16.msra.mxu0 0
      %492 = vmatprep.subr.bf16.mxu0 0
      %493 = vmatpush1.bf16.msra.mxu0 0
      %494 = vmatprep.subr.bf16.mxu0 0
      %495 = vmatpush1.bf16.msra.mxu0 0
      %496 = vmatprep.subr.bf16.mxu0 0
      %497 = vmatpush1.bf16.msra.mxu0 0
      %498 = vmatprep.subr.bf16.mxu0 0
      %499 = vmatpush1.bf16.msra.mxu0 0
      %500 = vmatprep.subr.bf16.mxu0 0
      %501 = vmatpush1.bf16.msra.mxu0 0
      %502 = vmatprep.mubr.bf16.mxu0 0
      %503 = vmatmul.mubr.bf16.gmra.mrb[0].mxu0 %v468
      %v504 = vpop.f32.mrb[0].mxu0
      %v505 = vadd.f32 %v429, %v504
      %v506 = vpop.f32.mrb[0].mxu0
      %v507 = vadd.f32 %v433, %v506
      %v508 = vpop.f32.mrb[0].mxu0
      %v509 = vpop.f32.mrb[0].mxu0
      %510 = vdwg.mxu0
      %511 = vmatprep.subr.bf16.mxu0 %v364
      %512 = vmatpush1.bf16.msra.mxu0 %v363
      %513 = vmatprep.subr.bf16.mxu0 %v372
      %514 = vmatpush1.bf16.msra.mxu0 %v371
      %515 = vmatprep.subr.bf16.mxu0 %v380
      %516 = vmatpush1.bf16.msra.mxu0 %v379
      %517 = vmatprep.subr.bf16.mxu0 %v388
      %518 = vmatpush1.bf16.msra.mxu0 %v387
      %519 = vmatprep.subr.bf16.mxu0 0
      %520 = vmatpush1.bf16.msra.mxu0 0
      %521 = vmatprep.subr.bf16.mxu0 0
      %522 = vmatpush1.bf16.msra.mxu0 0
      %523 = vmatprep.subr.bf16.mxu0 0
      %524 = vmatpush1.bf16.msra.mxu0 0
      %525 = vmatprep.subr.bf16.mxu0 0
      %526 = vmatpush1.bf16.msra.mxu0 0
      %527 = vmatprep.subr.bf16.mxu0 0
      %528 = vmatpush1.bf16.msra.mxu0 0
      %529 = vmatprep.subr.bf16.mxu0 0
      %530 = vmatpush1.bf16.msra.mxu0 0
      %531 = vmatprep.subr.bf16.mxu0 0
      %532 = vmatpush1.bf16.msra.mxu0 0
      %533 = vmatprep.subr.bf16.mxu0 0
      %534 = vmatpush1.bf16.msra.mxu0 0
      %535 = vmatprep.subr.bf16.mxu0 0
      %536 = vmatpush1.bf16.msra.mxu0 0
      %537 = vmatprep.subr.bf16.mxu0 0
      %538 = vmatpush1.bf16.msra.mxu0 0
      %539 = vmatprep.subr.bf16.mxu0 0
      %540 = vmatpush1.bf16.msra.mxu0 0
      %541 = vmatprep.subr.bf16.mxu0 0
      %542 = vmatpush1.bf16.msra.mxu0 0
      %543 = vmatprep.mubr.bf16.mxu0 0
      %544 = vmatmul.mubr.bf16.gmra.mrb[0].mxu0 %v468
      %v545 = vpop.f32.mrb[0].mxu0
      %v546 = vadd.f32 %v437, %v545
      %v547 = vpop.f32.mrb[0].mxu0
      %v548 = vadd.f32 %v441, %v547
      %v549 = vpop.f32.mrb[0].mxu0
      %v550 = vpop.f32.mrb[0].mxu0
      %551 = vdwg.mxu0
      %552 = vmatprep.subr.bf16.mxu0 %v366
      %553 = vmatpush1.bf16.msra.mxu0 %v365
      %554 = vmatprep.subr.bf16.mxu0 %v374
      %555 = vmatpush1.bf16.msra.mxu0 %v373
      %556 = vmatprep.subr.bf16.mxu0 %v382
      %557 = vmatpush1.bf16.msra.mxu0 %v381
      %558 = vmatprep.subr.bf16.mxu0 %v390
      %559 = vmatpush1.bf16.msra.mxu0 %v389
      %560 = vmatprep.subr.bf16.mxu0 0
      %561 = vmatpush1.bf16.msra.mxu0 0
      %562 = vmatprep.subr.bf16.mxu0 0
      %563 = vmatpush1.bf16.msra.mxu0 0
      %564 = vmatprep.subr.bf16.mxu0 0
      %565 = vmatpush1.bf16.msra.mxu0 0
      %566 = vmatprep.subr.bf16.mxu0 0
      %567 = vmatpush1.bf16.msra.mxu0 0
      %568 = vmatprep.subr.bf16.mxu0 0
      %569 = vmatpush1.bf16.msra.mxu0 0
      %570 = vmatprep.subr.bf16.mxu0 0
      %571 = vmatpush1.bf16.msra.mxu0 0
      %572 = vmatprep.subr.bf16.mxu0 0
      %573 = vmatpush1.bf16.msra.mxu0 0
      %574 = vmatprep.subr.bf16.mxu0 0
      %575 = vmatpush1.bf16.msra.mxu0 0
      %576 = vmatprep.subr.bf16.mxu0 0
      %577 = vmatpush1.bf16.msra.mxu0 0
      %578 = vmatprep.subr.bf16.mxu0 0
      %579 = vmatpush1.bf16.msra.mxu0 0
      %580 = vmatprep.subr.bf16.mxu0 0
      %581 = vmatpush1.bf16.msra.mxu0 0
      %582 = vmatprep.subr.bf16.mxu0 0
      %583 = vmatpush1.bf16.msra.mxu0 0
      %584 = vmatprep.mubr.bf16.mxu0 0
      %585 = vmatmul.mubr.bf16.gmra.mrb[0].mxu0 %v468
      %v586 = vpop.f32.mrb[0].mxu0
      %v587 = vadd.f32 %v445, %v586
      %v588 = vpop.f32.mrb[0].mxu0
      %v589 = vadd.f32 %v449, %v588
      %v590 = vpop.f32.mrb[0].mxu0
      %v591 = vpop.f32.mrb[0].mxu0
      %592 = vdwg.mxu0
      %593 = vmatprep.subr.bf16.mxu0 %v368
      %594 = vmatpush1.bf16.msra.mxu0 %v367
      %595 = vmatprep.subr.bf16.mxu0 %v376
      %596 = vmatpush1.bf16.msra.mxu0 %v375
      %597 = vmatprep.subr.bf16.mxu0 %v384
      %598 = vmatpush1.bf16.msra.mxu0 %v383
      %599 = vmatprep.subr.bf16.mxu0 %v392
      %600 = vmatpush1.bf16.msra.mxu0 %v391
      %601 = vmatprep.subr.bf16.mxu0 0
      %602 = vmatpush1.bf16.msra.mxu0 0
      %603 = vmatprep.subr.bf16.mxu0 0
      %604 = vmatpush1.bf16.msra.mxu0 0
      %605 = vmatprep.subr.bf16.mxu0 0
      %606 = vmatpush1.bf16.msra.mxu0 0
      %607 = vmatprep.subr.bf16.mxu0 0
      %608 = vmatpush1.bf16.msra.mxu0 0
      %609 = vmatprep.subr.bf16.mxu0 0
      %610 = vmatpush1.bf16.msra.mxu0 0
      %611 = vmatprep.subr.bf16.mxu0 0
      %612 = vmatpush1.bf16.msra.mxu0 0
      %613 = vmatprep.subr.bf16.mxu0 0
      %614 = vmatpush1.bf16.msra.mxu0 0
      %615 = vmatprep.subr.bf16.mxu0 0
      %616 = vmatpush1.bf16.msra.mxu0 0
      %617 = vmatprep.subr.bf16.mxu0 0
      %618 = vmatpush1.bf16.msra.mxu0 0
      %619 = vmatprep.subr.bf16.mxu0 0
      %620 = vmatpush1.bf16.msra.mxu0 0
      %621 = vmatprep.subr.bf16.mxu0 0
      %622 = vmatpush1.bf16.msra.mxu0 0
      %623 = vmatprep.subr.bf16.mxu0 0
      %624 = vmatpush1.bf16.msra.mxu0 0
      %625 = vmatprep.mubr.bf16.mxu0 0
      %626 = vmatmul.mubr.bf16.gmra.mrb[0].mxu0 %v468
      %v627 = vpop.f32.mrb[0].mxu0
      %v628 = vadd.f32 %v453, %v627
      %v629 = vpop.f32.mrb[0].mxu0
      %v630 = vadd.f32 %v457, %v629
      %v631 = vpop.f32.mrb[0].mxu0
      %v632 = vpop.f32.mrb[0].mxu0
      %633 = vdwg.mxu0
      %v634 = vcombine.low %v505, %v546
      %v636 = vunpack.c.l.s4 1983009808
      %v637 = vunpack.c.0.s8 %v636
      %v638 = vlaneseq
      %v639 = vshrl.u32 %v638, 7
      %v640 = vsub.s32 %v637, %v639
      %v641 = vrot.slane %v634, %v640
      %v642 = vcombine.low %v507, %v548
      %v644 = vunpack.c.l.s4 1983009808
      %v645 = vunpack.c.0.s8 %v644
      %v646 = vlaneseq
      %v647 = vshrl.u32 %v646, 7
      %v648 = vsub.s32 %v645, %v647
      %v649 = vrot.slane %v642, %v648
      %v650 = vcombine.low %v587, %v628
      %v652 = vunpack.c.l.s4 1983009808
      %v653 = vunpack.c.0.s8 %v652
      %v654 = vlaneseq
      %v655 = vshrl.u32 %v654, 7
      %v656 = vsub.s32 %v653, %v655
      %v657 = vrot.slane %v650, %v656
      %v658 = vcombine.low %v589, %v630
      %v660 = vunpack.c.l.s4 1983009808
      %v661 = vunpack.c.0.s8 %v660
      %v662 = vlaneseq
      %v663 = vshrl.u32 %v662, 7
      %v664 = vsub.s32 %v661, %v663
      %v665 = vrot.slane %v658, %v664
      %v666 = vcombine.low %v641, %v649
      %v668 = vunpack.c.l.s4 1934713408
      %v669 = vunpack.c.0.s8 %v668
      %v670 = vlaneseq
      %v671 = vshrl.u32 %v670, 7
      %v672 = vsub.s32 %v669, %v671
      %v673 = vrot.slane %v666, %v672
      %v674 = vcombine.low %v657, %v665
      %v676 = vunpack.c.l.s4 1934713408
      %v677 = vunpack.c.0.s8 %v676
      %v678 = vlaneseq
      %v679 = vshrl.u32 %v678, 7
      %v680 = vsub.s32 %v677, %v679
      %v681 = vrot.slane %v674, %v680
      %v682 = vcombine.low %v673, %v681
      %v683 = vpack.c.bf16 %v682, %v682
      %v685 = vunpack.c.l.s4 1983009808
      %v686 = vunpack.c.0.s8 %v685
      %v687 = vlaneseq
      %v688 = vshrl.u32 %v687, 7
      %v689 = vsub.s32 %v686, %v688
      %v690 = vrot.slane %v683, %v689
      %v691 = vcombine.high %v690, 0
      %v693 = vunpack.c.l.s4 1934713408
      %v694 = vunpack.c.0.s8 %v693
      %v695 = vlaneseq
      %v696 = vshrl.u32 %v695, 7
      %v697 = vsub.s32 %v694, %v696
      %v698 = vrot.slane %v690, %v697
      %v700 = vunpack.c.l.s4 1934713408
      %v701 = vunpack.c.0.s8 %v700
      %v702 = vlaneseq
      %v703 = vshrl.u32 %v702, 7
      %v704 = vsub.s32 %v701, %v703
      %v705 = vrot.slane %v691, %v704
      %v706 = vcombine.high %v698, 0
      %v707 = vcombine.high %v705, 0
      %v710 = vpack.i.b16 0, %v698
      %v712 = vshrl.u32 %v698, 16
      %v713 = vshrl.u32 0, 16
      %v714 = vpack.i.b16 %v713, %v712
      %v717 = vpack.i.b16 0, %v706
      %v719 = vshrl.u32 %v706, 16
      %v720 = vpack.i.b16 %v713, %v719
      %v723 = vpack.i.b16 0, %v705
      %v725 = vshrl.u32 %v705, 16
      %v726 = vpack.i.b16 %v713, %v725
      %v729 = vpack.i.b16 0, %v707
      %v731 = vshrl.u32 %v707, 16
      %v732 = vpack.i.b16 %v713, %v731
      %v734 = vld [vmem:[%s3] sm:$0xf]
      %v735 = vld [vmem:[%s3 + $0x4] sm:$0xf]
      %v736 = vld [vmem:[%s3 + $0x8] sm:$0xf]
      %v737 = vld [vmem:[%s3 + $0xc] sm:$0xf]
      %v738 = vld [vmem:[%s3 + $0x10] sm:$0xf]
      %v739 = vld [vmem:[%s3 + $0x14] sm:$0xf]
      %v740 = vld [vmem:[%s3 + $0x18] sm:$0xf]
      %v741 = vld [vmem:[%s3 + $0x1c] sm:$0xf]
      %v742 = vld [vmem:[%s3 + $0x20] sm:$0xf]
      %v743 = vld [vmem:[%s3 + $0x24] sm:$0xf]
      %v744 = vld [vmem:[%s3 + $0x28] sm:$0xf]
      %v745 = vld [vmem:[%s3 + $0x2c] sm:$0xf]
      %v746 = vld [vmem:[%s3 + $0x30] sm:$0xf]
      %v747 = vld [vmem:[%s3 + $0x34] sm:$0xf]
      %v748 = vld [vmem:[%s3 + $0x38] sm:$0xf]
      %v749 = vld [vmem:[%s3 + $0x3c] sm:$0xf]
      %v750 = vld [vmem:[%s3 + $0x40] sm:$0xf]
      %v751 = vld [vmem:[%s3 + $0x44] sm:$0xf]
      %v752 = vld [vmem:[%s3 + $0x48] sm:$0xf]
      %v753 = vld [vmem:[%s3 + $0x4c] sm:$0xf]
      %v754 = vld [vmem:[%s3 + $0x50] sm:$0xf]
      %v755 = vld [vmem:[%s3 + $0x54] sm:$0xf]
      %v756 = vld [vmem:[%s3 + $0x58] sm:$0xf]
      %v757 = vld [vmem:[%s3 + $0x5c] sm:$0xf]
      %v758 = vld [vmem:[%s3 + $0x60] sm:$0xf]
      %v759 = vld [vmem:[%s3 + $0x64] sm:$0xf]
      %v760 = vld [vmem:[%s3 + $0x68] sm:$0xf]
      %v761 = vld [vmem:[%s3 + $0x6c] sm:$0xf]
      %v762 = vld [vmem:[%s3 + $0x70] sm:$0xf]
      %v763 = vld [vmem:[%s3 + $0x74] sm:$0xf]
      %v764 = vld [vmem:[%s3 + $0x78] sm:$0xf]
      %v765 = vld [vmem:[%s3 + $0x7c] sm:$0xf]
      %v766 = vld [vmem:[%s3 + $0x80] sm:$0xf]
      %v767 = vld [vmem:[%s3 + $0x84] sm:$0xf]
      %v768 = vld [vmem:[%s3 + $0x88] sm:$0xf]
      %v769 = vld [vmem:[%s3 + $0x8c] sm:$0xf]
      %v770 = vld [vmem:[%s3 + $0x90] sm:$0xf]
      %v771 = vld [vmem:[%s3 + $0x94] sm:$0xf]
      %v772 = vld [vmem:[%s3 + $0x98] sm:$0xf]
      %v773 = vld [vmem:[%s3 + $0x9c] sm:$0xf]
      %v774 = vld [vmem:[%s3 + $0xa0] sm:$0xf]
      %v775 = vld [vmem:[%s3 + $0xa4] sm:$0xf]
      %v776 = vld [vmem:[%s3 + $0xa8] sm:$0xf]
      %v777 = vld [vmem:[%s3 + $0xac] sm:$0xf]
      %v778 = vld [vmem:[%s3 + $0xb0] sm:$0xf]
      %v779 = vld [vmem:[%s3 + $0xb4] sm:$0xf]
      %v780 = vld [vmem:[%s3 + $0xb8] sm:$0xf]
      %v781 = vld [vmem:[%s3 + $0xbc] sm:$0xf]
      %v782 = vld [vmem:[%s3 + $0xc0] sm:$0xf]
      %v783 = vld [vmem:[%s3 + $0xc4] sm:$0xf]
      %v784 = vld [vmem:[%s3 + $0xc8] sm:$0xf]
      %v785 = vld [vmem:[%s3 + $0xcc] sm:$0xf]
      %v786 = vld [vmem:[%s3 + $0xd0] sm:$0xf]
      %v787 = vld [vmem:[%s3 + $0xd4] sm:$0xf]
      %v788 = vld [vmem:[%s3 + $0xd8] sm:$0xf]
      %v789 = vld [vmem:[%s3 + $0xdc] sm:$0xf]
      %v790 = vld [vmem:[%s3 + $0xe0] sm:$0xf]
      %v791 = vld [vmem:[%s3 + $0xe4] sm:$0xf]
      %v792 = vld [vmem:[%s3 + $0xe8] sm:$0xf]
      %v793 = vld [vmem:[%s3 + $0xec] sm:$0xf]
      %v794 = vld [vmem:[%s3 + $0xf0] sm:$0xf]
      %v795 = vld [vmem:[%s3 + $0xf4] sm:$0xf]
      %v796 = vld [vmem:[%s3 + $0xf8] sm:$0xf]
      %v797 = vld [vmem:[%s3 + $0xfc] sm:$0xf]
      %v798 = vld [vmem:[%s3 + $0x100] sm:$0xf]
      %v799 = vld [vmem:[%s3 + $0x104] sm:$0xf]
      %v800 = vld [vmem:[%s3 + $0x108] sm:$0xf]
      %v801 = vld [vmem:[%s3 + $0x10c] sm:$0xf]
      %v802 = vld [vmem:[%s3 + $0x110] sm:$0xf]
      %v803 = vld [vmem:[%s3 + $0x114] sm:$0xf]
      %v804 = vld [vmem:[%s3 + $0x118] sm:$0xf]
      %v805 = vld [vmem:[%s3 + $0x11c] sm:$0xf]
      %v806 = vld [vmem:[%s3 + $0x120] sm:$0xf]
      %v807 = vld [vmem:[%s3 + $0x124] sm:$0xf]
      %v808 = vld [vmem:[%s3 + $0x128] sm:$0xf]
      %v809 = vld [vmem:[%s3 + $0x12c] sm:$0xf]
      %v810 = vld [vmem:[%s3 + $0x130] sm:$0xf]
      %v811 = vld [vmem:[%s3 + $0x134] sm:$0xf]
      %v812 = vld [vmem:[%s3 + $0x138] sm:$0xf]
      %v813 = vld [vmem:[%s3 + $0x13c] sm:$0xf]
      %v814 = vld [vmem:[%s3 + $0x140] sm:$0xf]
      %v815 = vld [vmem:[%s3 + $0x144] sm:$0xf]
      %v816 = vld [vmem:[%s3 + $0x148] sm:$0xf]
      %v817 = vld [vmem:[%s3 + $0x14c] sm:$0xf]
      %v818 = vld [vmem:[%s3 + $0x150] sm:$0xf]
      %v819 = vld [vmem:[%s3 + $0x154] sm:$0xf]
      %v820 = vld [vmem:[%s3 + $0x158] sm:$0xf]
      %v821 = vld [vmem:[%s3 + $0x15c] sm:$0xf]
      %v822 = vld [vmem:[%s3 + $0x160] sm:$0xf]
      %v823 = vld [vmem:[%s3 + $0x164] sm:$0xf]
      %v824 = vld [vmem:[%s3 + $0x168] sm:$0xf]
      %v825 = vld [vmem:[%s3 + $0x16c] sm:$0xf]
      %v826 = vld [vmem:[%s3 + $0x170] sm:$0xf]
      %v827 = vld [vmem:[%s3 + $0x174] sm:$0xf]
      %v828 = vld [vmem:[%s3 + $0x178] sm:$0xf]
      %v829 = vld [vmem:[%s3 + $0x17c] sm:$0xf]
      %v830 = vld [vmem:[%s3 + $0x180] sm:$0xf]
      %v831 = vld [vmem:[%s3 + $0x184] sm:$0xf]
      %v832 = vld [vmem:[%s3 + $0x188] sm:$0xf]
      %v833 = vld [vmem:[%s3 + $0x18c] sm:$0xf]
      %v834 = vld [vmem:[%s3 + $0x190] sm:$0xf]
      %v835 = vld [vmem:[%s3 + $0x194] sm:$0xf]
      %v836 = vld [vmem:[%s3 + $0x198] sm:$0xf]
      %v837 = vld [vmem:[%s3 + $0x19c] sm:$0xf]
      %v838 = vld [vmem:[%s3 + $0x1a0] sm:$0xf]
      %v839 = vld [vmem:[%s3 + $0x1a4] sm:$0xf]
      %v840 = vld [vmem:[%s3 + $0x1a8] sm:$0xf]
      %v841 = vld [vmem:[%s3 + $0x1ac] sm:$0xf]
      %v842 = vld [vmem:[%s3 + $0x1b0] sm:$0xf]
      %v843 = vld [vmem:[%s3 + $0x1b4] sm:$0xf]
      %v844 = vld [vmem:[%s3 + $0x1b8] sm:$0xf]
      %v845 = vld [vmem:[%s3 + $0x1bc] sm:$0xf]
      %v846 = vld [vmem:[%s3 + $0x1c0] sm:$0xf]
      %v847 = vld [vmem:[%s3 + $0x1c4] sm:$0xf]
      %v848 = vld [vmem:[%s3 + $0x1c8] sm:$0xf]
      %v849 = vld [vmem:[%s3 + $0x1cc] sm:$0xf]
      %v850 = vld [vmem:[%s3 + $0x1d0] sm:$0xf]
      %v851 = vld [vmem:[%s3 + $0x1d4] sm:$0xf]
      %v852 = vld [vmem:[%s3 + $0x1d8] sm:$0xf]
      %v853 = vld [vmem:[%s3 + $0x1dc] sm:$0xf]
      %v854 = vld [vmem:[%s3 + $0x1e0] sm:$0xf]
      %v855 = vld [vmem:[%s3 + $0x1e4] sm:$0xf]
      %v856 = vld [vmem:[%s3 + $0x1e8] sm:$0xf]
      %v857 = vld [vmem:[%s3 + $0x1ec] sm:$0xf]
      %v858 = vld [vmem:[%s3 + $0x1f0] sm:$0xf]
      %v859 = vld [vmem:[%s3 + $0x1f4] sm:$0xf]
      %v860 = vld [vmem:[%s3 + $0x1f8] sm:$0xf]
      %v861 = vld [vmem:[%s3 + $0x1fc] sm:$0xf]
      %v862 = vld [vmem:[%s4] sm:$0xff]
      %v864 = vcombine.high %v862, %v862
      %v866 = vunpack.c.l.s4 1966171168
      %v867 = vunpack.c.0.s8 %v866
      %v868 = vlaneseq
      %v869 = vshrl.u32 %v868, 7
      %v870 = vsub.s32 %v867, %v869
      %v871 = vrot.slane %v862, %v870
      %v873 = vunpack.c.l.s4 1966171168
      %v874 = vunpack.c.0.s8 %v873
      %v875 = vlaneseq
      %v876 = vshrl.u32 %v875, 7
      %v877 = vsub.s32 %v874, %v876
      %v878 = vrot.slane %v864, %v877
      %v879 = vcombine.high %v871, %v871
      %v880 = vcombine.high %v878, %v878
      %v882 = vunpack.c.l.s4 1966171168
      %v883 = vunpack.c.0.s8 %v882
      %v884 = vlaneseq
      %v885 = vshrl.u32 %v884, 7
      %v886 = vsub.s32 %v883, %v885
      %v887 = vrot.slane %v871, %v886
      %v889 = vunpack.c.l.s4 1966171168
      %v890 = vunpack.c.0.s8 %v889
      %v891 = vlaneseq
      %v892 = vshrl.u32 %v891, 7
      %v893 = vsub.s32 %v890, %v892
      %v894 = vrot.slane %v878, %v893
      %v896 = vunpack.c.l.s4 1966171168
      %v897 = vunpack.c.0.s8 %v896
      %v898 = vlaneseq
      %v899 = vshrl.u32 %v898, 7
      %v900 = vsub.s32 %v897, %v899
      %v901 = vrot.slane %v879, %v900
      %v903 = vunpack.c.l.s4 1966171168
      %v904 = vunpack.c.0.s8 %v903
      %v905 = vlaneseq
      %v906 = vshrl.u32 %v905, 7
      %v907 = vsub.s32 %v904, %v906
      %v908 = vrot.slane %v880, %v907
      %v909 = vcombine.high %v887, %v887
      %v910 = vcombine.high %v894, %v894
      %v911 = vcombine.high %v901, %v901
      %v912 = vcombine.high %v908, %v908
      %v937 = vunpack.c.l.b16 %v734
      %v938 = vunpack.c.l.b16 %v735
      %v939 = vunpack.c.l.b16 %v736
      %v940 = vunpack.c.l.b16 %v737
      %v941 = vunpack.c.l.b16 %v738
      %v942 = vunpack.c.l.b16 %v739
      %v943 = vunpack.c.l.b16 %v740
      %v944 = vunpack.c.l.b16 %v741
      %v945 = vunpack.c.l.b16 %v742
      %v946 = vunpack.c.l.b16 %v743
      %v947 = vunpack.c.l.b16 %v744
      %v948 = vunpack.c.l.b16 %v745
      %v949 = vunpack.c.l.b16 %v746
      %v950 = vunpack.c.l.b16 %v747
      %v951 = vunpack.c.l.b16 %v748
      %v952 = vunpack.c.l.b16 %v749
      %v953 = vpack.c.b16 %v938, %v937
      %v954 = vpack.c.b16 %v940, %v939
      %v955 = vpack.c.b16 %v942, %v941
      %v956 = vpack.c.b16 %v944, %v943
      %v957 = vpack.c.b16 %v946, %v945
      %v958 = vpack.c.b16 %v948, %v947
      %v959 = vpack.c.b16 %v950, %v949
      %v960 = vpack.c.b16 %v952, %v951
      %969 = vmatprep.subr.bf16.mxu0 0
      %970 = vmatpush1.bf16.msra.mxu0 %v953
      %971 = vmatprep.subr.bf16.mxu0 0
      %972 = vmatpush1.bf16.msra.mxu0 %v954
      %973 = vmatprep.subr.bf16.mxu0 0
      %974 = vmatpush1.bf16.msra.mxu0 %v955
      %975 = vmatprep.subr.bf16.mxu0 0
      %976 = vmatpush1.bf16.msra.mxu0 %v956
      %977 = vmatprep.subr.bf16.mxu0 0
      %978 = vmatpush1.bf16.msra.mxu0 %v957
      %979 = vmatprep.subr.bf16.mxu0 0
      %980 = vmatpush1.bf16.msra.mxu0 %v958
      %981 = vmatprep.subr.bf16.mxu0 0
      %982 = vmatpush1.bf16.msra.mxu0 %v959
      %983 = vmatprep.subr.bf16.mxu0 0
      %984 = vmatpush1.bf16.msra.mxu0 %v960
      %985 = vmatprep.subr.bf16.mxu0 0
      %986 = vmatpush1.bf16.msra.mxu0 0
      %987 = vmatprep.subr.bf16.mxu0 0
      %988 = vmatpush1.bf16.msra.mxu0 0
      %989 = vmatprep.subr.bf16.mxu0 0
      %990 = vmatpush1.bf16.msra.mxu0 0
      %991 = vmatprep.subr.bf16.mxu0 0
      %992 = vmatpush1.bf16.msra.mxu0 0
      %993 = vmatprep.subr.bf16.mxu0 0
      %994 = vmatpush1.bf16.msra.mxu0 0
      %995 = vmatprep.subr.bf16.mxu0 0
      %996 = vmatpush1.bf16.msra.mxu0 0
      %997 = vmatprep.subr.bf16.mxu0 0
      %998 = vmatpush1.bf16.msra.mxu0 0
      %999 = vmatprep.subr.bf16.mxu0 0
      %1000 = vmatpush1.bf16.msra.mxu0 0
      %1001 = vmatprep.mubr.bf16.mxu0 0
      %1002 = vmatmul.mubr.bf16.gmra.mrb[0].mxu0 %v710
      %v1003 = vpop.f32.mrb[0].mxu0
      %v1004 = vadd.f32 %v887, %v1003
      %v1005 = vpop.f32.mrb[0].mxu0
      %v1006 = vpop.f32.mrb[0].mxu0
      %v1007 = vpop.f32.mrb[0].mxu0
      %1008 = vdwg.mxu0
      %v1025 = vunpack.c.l.b16 %v750
      %v1026 = vunpack.c.l.b16 %v751
      %v1027 = vunpack.c.l.b16 %v752
      %v1028 = vunpack.c.l.b16 %v753
      %v1029 = vunpack.c.l.b16 %v754
      %v1030 = vunpack.c.l.b16 %v755
      %v1031 = vunpack.c.l.b16 %v756
      %v1032 = vunpack.c.l.b16 %v757
      %v1033 = vunpack.c.l.b16 %v758
      %v1034 = vunpack.c.l.b16 %v759
      %v1035 = vunpack.c.l.b16 %v760
      %v1036 = vunpack.c.l.b16 %v761
      %v1037 = vunpack.c.l.b16 %v762
      %v1038 = vunpack.c.l.b16 %v763
      %v1039 = vunpack.c.l.b16 %v764
      %v1040 = vunpack.c.l.b16 %v765
      %v1041 = vpack.c.b16 %v1026, %v1025
      %v1042 = vpack.c.b16 %v1028, %v1027
      %v1043 = vpack.c.b16 %v1030, %v1029
      %v1044 = vpack.c.b16 %v1032, %v1031
      %v1045 = vpack.c.b16 %v1034, %v1033
      %v1046 = vpack.c.b16 %v1036, %v1035
      %v1047 = vpack.c.b16 %v1038, %v1037
      %v1048 = vpack.c.b16 %v1040, %v1039
      %1057 = vmatprep.subr.bf16.mxu0 0
      %1058 = vmatpush1.bf16.msra.mxu0 %v1041
      %1059 = vmatprep.subr.bf16.mxu0 0
      %1060 = vmatpush1.bf16.msra.mxu0 %v1042
      %1061 = vmatprep.subr.bf16.mxu0 0
      %1062 = vmatpush1.bf16.msra.mxu0 %v1043
      %1063 = vmatprep.subr.bf16.mxu0 0
      %1064 = vmatpush1.bf16.msra.mxu0 %v1044
      %1065 = vmatprep.subr.bf16.mxu0 0
      %1066 = vmatpush1.bf16.msra.mxu0 %v1045
      %1067 = vmatprep.subr.bf16.mxu0 0
      %1068 = vmatpush1.bf16.msra.mxu0 %v1046
      %1069 = vmatprep.subr.bf16.mxu0 0
      %1070 = vmatpush1.bf16.msra.mxu0 %v1047
      %1071 = vmatprep.subr.bf16.mxu0 0
      %1072 = vmatpush1.bf16.msra.mxu0 %v1048
      %1073 = vmatprep.subr.bf16.mxu0 0
      %1074 = vmatpush1.bf16.msra.mxu0 0
      %1075 = vmatprep.subr.bf16.mxu0 0
      %1076 = vmatpush1.bf16.msra.mxu0 0
      %1077 = vmatprep.subr.bf16.mxu0 0
      %1078 = vmatpush1.bf16.msra.mxu0 0
      %1079 = vmatprep.subr.bf16.mxu0 0
      %1080 = vmatpush1.bf16.msra.mxu0 0
      %1081 = vmatprep.subr.bf16.mxu0 0
      %1082 = vmatpush1.bf16.msra.mxu0 0
      %1083 = vmatprep.subr.bf16.mxu0 0
      %1084 = vmatpush1.bf16.msra.mxu0 0
      %1085 = vmatprep.subr.bf16.mxu0 0
      %1086 = vmatpush1.bf16.msra.mxu0 0
      %1087 = vmatprep.subr.bf16.mxu0 0
      %1088 = vmatpush1.bf16.msra.mxu0 0
      %1089 = vmatprep.mubr.bf16.mxu0 0
      %1090 = vmatmul.mubr.bf16.gmra.mrb[0].mxu0 %v714
      %v1091 = vpop.f32.mrb[0].mxu0
      %v1092 = vadd.f32 %v901, %v1091
      %v1093 = vpop.f32.mrb[0].mxu0
      %v1094 = vpop.f32.mrb[0].mxu0
      %v1095 = vpop.f32.mrb[0].mxu0
      %1096 = vdwg.mxu0
      %v1113 = vunpack.c.l.b16 %v766
      %v1114 = vunpack.c.l.b16 %v767
      %v1115 = vunpack.c.l.b16 %v768
      %v1116 = vunpack.c.l.b16 %v769
      %v1117 = vunpack.c.l.b16 %v770
      %v1118 = vunpack.c.l.b16 %v771
      %v1119 = vunpack.c.l.b16 %v772
      %v1120 = vunpack.c.l.b16 %v773
      %v1121 = vunpack.c.l.b16 %v774
      %v1122 = vunpack.c.l.b16 %v775
      %v1123 = vunpack.c.l.b16 %v776
      %v1124 = vunpack.c.l.b16 %v777
      %v1125 = vunpack.c.l.b16 %v778
      %v1126 = vunpack.c.l.b16 %v779
      %v1127 = vunpack.c.l.b16 %v780
      %v1128 = vunpack.c.l.b16 %v781
      %v1129 = vpack.c.b16 %v1114, %v1113
      %v1130 = vpack.c.b16 %v1116, %v1115
      %v1131 = vpack.c.b16 %v1118, %v1117
      %v1132 = vpack.c.b16 %v1120, %v1119
      %v1133 = vpack.c.b16 %v1122, %v1121
      %v1134 = vpack.c.b16 %v1124, %v1123
      %v1135 = vpack.c.b16 %v1126, %v1125
      %v1136 = vpack.c.b16 %v1128, %v1127
      %1145 = vmatprep.subr.bf16.mxu0 0
      %1146 = vmatpush1.bf16.msra.mxu0 %v1129
      %1147 = vmatprep.subr.bf16.mxu0 0
      %1148 = vmatpush1.bf16.msra.mxu0 %v1130
      %1149 = vmatprep.subr.bf16.mxu0 0
      %1150 = vmatpush1.bf16.msra.mxu0 %v1131
      %1151 = vmatprep.subr.bf16.mxu0 0
      %1152 = vmatpush1.bf16.msra.mxu0 %v1132
      %1153 = vmatprep.subr.bf16.mxu0 0
      %1154 = vmatpush1.bf16.msra.mxu0 %v1133
      %1155 = vmatprep.subr.bf16.mxu0 0
      %1156 = vmatpush1.bf16.msra.mxu0 %v1134
      %1157 = vmatprep.subr.bf16.mxu0 0
      %1158 = vmatpush1.bf16.msra.mxu0 %v1135
      %1159 = vmatprep.subr.bf16.mxu0 0
      %1160 = vmatpush1.bf16.msra.mxu0 %v1136
      %1161 = vmatprep.subr.bf16.mxu0 0
      %1162 = vmatpush1.bf16.msra.mxu0 0
      %1163 = vmatprep.subr.bf16.mxu0 0
      %1164 = vmatpush1.bf16.msra.mxu0 0
      %1165 = vmatprep.subr.bf16.mxu0 0
      %1166 = vmatpush1.bf16.msra.mxu0 0
      %1167 = vmatprep.subr.bf16.mxu0 0
      %1168 = vmatpush1.bf16.msra.mxu0 0
      %1169 = vmatprep.subr.bf16.mxu0 0
      %1170 = vmatpush1.bf16.msra.mxu0 0
      %1171 = vmatprep.subr.bf16.mxu0 0
      %1172 = vmatpush1.bf16.msra.mxu0 0
      %1173 = vmatprep.subr.bf16.mxu0 0
      %1174 = vmatpush1.bf16.msra.mxu0 0
      %1175 = vmatprep.subr.bf16.mxu0 0
      %1176 = vmatpush1.bf16.msra.mxu0 0
      %1177 = vmatprep.mubr.bf16.mxu0 0
      %1178 = vmatmul.mubr.bf16.gmra.mrb[0].mxu0 %v717
      %v1179 = vpop.f32.mrb[0].mxu0
      %v1180 = vadd.f32 %v909, %v1179
      %v1181 = vpop.f32.mrb[0].mxu0
      %v1182 = vpop.f32.mrb[0].mxu0
      %v1183 = vpop.f32.mrb[0].mxu0
      %1184 = vdwg.mxu0
      %v1201 = vunpack.c.l.b16 %v782
      %v1202 = vunpack.c.l.b16 %v783
      %v1203 = vunpack.c.l.b16 %v784
      %v1204 = vunpack.c.l.b16 %v785
      %v1205 = vunpack.c.l.b16 %v786
      %v1206 = vunpack.c.l.b16 %v787
      %v1207 = vunpack.c.l.b16 %v788
      %v1208 = vunpack.c.l.b16 %v789
      %v1209 = vunpack.c.l.b16 %v790
      %v1210 = vunpack.c.l.b16 %v791
      %v1211 = vunpack.c.l.b16 %v792
      %v1212 = vunpack.c.l.b16 %v793
      %v1213 = vunpack.c.l.b16 %v794
      %v1214 = vunpack.c.l.b16 %v795
      %v1215 = vunpack.c.l.b16 %v796
      %v1216 = vunpack.c.l.b16 %v797
      %v1217 = vpack.c.b16 %v1202, %v1201
      %v1218 = vpack.c.b16 %v1204, %v1203
      %v1219 = vpack.c.b16 %v1206, %v1205
      %v1220 = vpack.c.b16 %v1208, %v1207
      %v1221 = vpack.c.b16 %v1210, %v1209
      %v1222 = vpack.c.b16 %v1212, %v1211
      %v1223 = vpack.c.b16 %v1214, %v1213
      %v1224 = vpack.c.b16 %v1216, %v1215
      %1233 = vmatprep.subr.bf16.mxu0 0
      %1234 = vmatpush1.bf16.msra.mxu0 %v1217
      %1235 = vmatprep.subr.bf16.mxu0 0
      %1236 = vmatpush1.bf16.msra.mxu0 %v1218
      %1237 = vmatprep.subr.bf16.mxu0 0
      %1238 = vmatpush1.bf16.msra.mxu0 %v1219
      %1239 = vmatprep.subr.bf16.mxu0 0
      %1240 = vmatpush1.bf16.msra.mxu0 %v1220
      %1241 = vmatprep.subr.bf16.mxu0 0
      %1242 = vmatpush1.bf16.msra.mxu0 %v1221
      %1243 = vmatprep.subr.bf16.mxu0 0
      %1244 = vmatpush1.bf16.msra.mxu0 %v1222
      %1245 = vmatprep.subr.bf16.mxu0 0
      %1246 = vmatpush1.bf16.msra.mxu0 %v1223
      %1247 = vmatprep.subr.bf16.mxu0 0
      %1248 = vmatpush1.bf16.msra.mxu0 %v1224
      %1249 = vmatprep.subr.bf16.mxu0 0
      %1250 = vmatpush1.bf16.msra.mxu0 0
      %1251 = vmatprep.subr.bf16.mxu0 0
      %1252 = vmatpush1.bf16.msra.mxu0 0
      %1253 = vmatprep.subr.bf16.mxu0 0
      %1254 = vmatpush1.bf16.msra.mxu0 0
      %1255 = vmatprep.subr.bf16.mxu0 0
      %1256 = vmatpush1.bf16.msra.mxu0 0
      %1257 = vmatprep.subr.bf16.mxu0 0
      %1258 = vmatpush1.bf16.msra.mxu0 0
      %1259 = vmatprep.subr.bf16.mxu0 0
      %1260 = vmatpush1.bf16.msra.mxu0 0
      %1261 = vmatprep.subr.bf16.mxu0 0
      %1262 = vmatpush1.bf16.msra.mxu0 0
      %1263 = vmatprep.subr.bf16.mxu0 0
      %1264 = vmatpush1.bf16.msra.mxu0 0
      %1265 = vmatprep.mubr.bf16.mxu0 0
      %1266 = vmatmul.mubr.bf16.gmra.mrb[0].mxu0 %v720
      %v1267 = vpop.f32.mrb[0].mxu0
      %v1268 = vadd.f32 %v911, %v1267
      %v1269 = vpop.f32.mrb[0].mxu0
      %v1270 = vpop.f32.mrb[0].mxu0
      %v1271 = vpop.f32.mrb[0].mxu0
      %1272 = vdwg.mxu0
      %v1289 = vunpack.c.l.b16 %v798
      %v1290 = vunpack.c.l.b16 %v799
      %v1291 = vunpack.c.l.b16 %v800
      %v1292 = vunpack.c.l.b16 %v801
      %v1293 = vunpack.c.l.b16 %v802
      %v1294 = vunpack.c.l.b16 %v803
      %v1295 = vunpack.c.l.b16 %v804
      %v1296 = vunpack.c.l.b16 %v805
      %v1297 = vunpack.c.l.b16 %v806
      %v1298 = vunpack.c.l.b16 %v807
      %v1299 = vunpack.c.l.b16 %v808
      %v1300 = vunpack.c.l.b16 %v809
      %v1301 = vunpack.c.l.b16 %v810
      %v1302 = vunpack.c.l.b16 %v811
      %v1303 = vunpack.c.l.b16 %v812
      %v1304 = vunpack.c.l.b16 %v813
      %v1305 = vpack.c.b16 %v1290, %v1289
      %v1306 = vpack.c.b16 %v1292, %v1291
      %v1307 = vpack.c.b16 %v1294, %v1293
      %v1308 = vpack.c.b16 %v1296, %v1295
      %v1309 = vpack.c.b16 %v1298, %v1297
      %v1310 = vpack.c.b16 %v1300, %v1299
      %v1311 = vpack.c.b16 %v1302, %v1301
      %v1312 = vpack.c.b16 %v1304, %v1303
      %1321 = vmatprep.subr.bf16.mxu0 0
      %1322 = vmatpush1.bf16.msra.mxu0 %v1305
      %1323 = vmatprep.subr.bf16.mxu0 0
      %1324 = vmatpush1.bf16.msra.mxu0 %v1306
      %1325 = vmatprep.subr.bf16.mxu0 0
      %1326 = vmatpush1.bf16.msra.mxu0 %v1307
      %1327 = vmatprep.subr.bf16.mxu0 0
      %1328 = vmatpush1.bf16.msra.mxu0 %v1308
      %1329 = vmatprep.subr.bf16.mxu0 0
      %1330 = vmatpush1.bf16.msra.mxu0 %v1309
      %1331 = vmatprep.subr.bf16.mxu0 0
      %1332 = vmatpush1.bf16.msra.mxu0 %v1310
      %1333 = vmatprep.subr.bf16.mxu0 0
      %1334 = vmatpush1.bf16.msra.mxu0 %v1311
      %1335 = vmatprep.subr.bf16.mxu0 0
      %1336 = vmatpush1.bf16.msra.mxu0 %v1312
      %1337 = vmatprep.subr.bf16.mxu0 0
      %1338 = vmatpush1.bf16.msra.mxu0 0
      %1339 = vmatprep.subr.bf16.mxu0 0
      %1340 = vmatpush1.bf16.msra.mxu0 0
      %1341 = vmatprep.subr.bf16.mxu0 0
      %1342 = vmatpush1.bf16.msra.mxu0 0
      %1343 = vmatprep.subr.bf16.mxu0 0
      %1344 = vmatpush1.bf16.msra.mxu0 0
      %1345 = vmatprep.subr.bf16.mxu0 0
      %1346 = vmatpush1.bf16.msra.mxu0 0
      %1347 = vmatprep.subr.bf16.mxu0 0
      %1348 = vmatpush1.bf16.msra.mxu0 0
      %1349 = vmatprep.subr.bf16.mxu0 0
      %1350 = vmatpush1.bf16.msra.mxu0 0
      %1351 = vmatprep.subr.bf16.mxu0 0
      %1352 = vmatpush1.bf16.msra.mxu0 0
      %1353 = vmatprep.mubr.bf16.mxu0 0
      %1354 = vmatmul.mubr.bf16.gmra.mrb[0].mxu0 %v723
      %v1355 = vpop.f32.mrb[0].mxu0
      %v1356 = vadd.f32 %v894, %v1355
      %v1357 = vpop.f32.mrb[0].mxu0
      %v1358 = vpop.f32.mrb[0].mxu0
      %v1359 = vpop.f32.mrb[0].mxu0
      %1360 = vdwg.mxu0
      %v1377 = vunpack.c.l.b16 %v814
      %v1378 = vunpack.c.l.b16 %v815
      %v1379 = vunpack.c.l.b16 %v816
      %v1380 = vunpack.c.l.b16 %v817
      %v1381 = vunpack.c.l.b16 %v818
      %v1382 = vunpack.c.l.b16 %v819
      %v1383 = vunpack.c.l.b16 %v820
      %v1384 = vunpack.c.l.b16 %v821
      %v1385 = vunpack.c.l.b16 %v822
      %v1386 = vunpack.c.l.b16 %v823
      %v1387 = vunpack.c.l.b16 %v824
      %v1388 = vunpack.c.l.b16 %v825
      %v1389 = vunpack.c.l.b16 %v826
      %v1390 = vunpack.c.l.b16 %v827
      %v1391 = vunpack.c.l.b16 %v828
      %v1392 = vunpack.c.l.b16 %v829
      %v1393 = vpack.c.b16 %v1378, %v1377
      %v1394 = vpack.c.b16 %v1380, %v1379
      %v1395 = vpack.c.b16 %v1382, %v1381
      %v1396 = vpack.c.b16 %v1384, %v1383
      %v1397 = vpack.c.b16 %v1386, %v1385
      %v1398 = vpack.c.b16 %v1388, %v1387
      %v1399 = vpack.c.b16 %v1390, %v1389
      %v1400 = vpack.c.b16 %v1392, %v1391
      %1409 = vmatprep.subr.bf16.mxu0 0
      %1410 = vmatpush1.bf16.msra.mxu0 %v1393
      %1411 = vmatprep.subr.bf16.mxu0 0
      %1412 = vmatpush1.bf16.msra.mxu0 %v1394
      %1413 = vmatprep.subr.bf16.mxu0 0
      %1414 = vmatpush1.bf16.msra.mxu0 %v1395
      %1415 = vmatprep.subr.bf16.mxu0 0
      %1416 = vmatpush1.bf16.msra.mxu0 %v1396
      %1417 = vmatprep.subr.bf16.mxu0 0
      %1418 = vmatpush1.bf16.msra.mxu0 %v1397
      %1419 = vmatprep.subr.bf16.mxu0 0
      %1420 = vmatpush1.bf16.msra.mxu0 %v1398
      %1421 = vmatprep.subr.bf16.mxu0 0
      %1422 = vmatpush1.bf16.msra.mxu0 %v1399
      %1423 = vmatprep.subr.bf16.mxu0 0
      %1424 = vmatpush1.bf16.msra.mxu0 %v1400
      %1425 = vmatprep.subr.bf16.mxu0 0
      %1426 = vmatpush1.bf16.msra.mxu0 0
      %1427 = vmatprep.subr.bf16.mxu0 0
      %1428 = vmatpush1.bf16.msra.mxu0 0
      %1429 = vmatprep.subr.bf16.mxu0 0
      %1430 = vmatpush1.bf16.msra.mxu0 0
      %1431 = vmatprep.subr.bf16.mxu0 0
      %1432 = vmatpush1.bf16.msra.mxu0 0
      %1433 = vmatprep.subr.bf16.mxu0 0
      %1434 = vmatpush1.bf16.msra.mxu0 0
      %1435 = vmatprep.subr.bf16.mxu0 0
      %1436 = vmatpush1.bf16.msra.mxu0 0
      %1437 = vmatprep.subr.bf16.mxu0 0
      %1438 = vmatpush1.bf16.msra.mxu0 0
      %1439 = vmatprep.subr.bf16.mxu0 0
      %1440 = vmatpush1.bf16.msra.mxu0 0
      %1441 = vmatprep.mubr.bf16.mxu0 0
      %1442 = vmatmul.mubr.bf16.gmra.mrb[0].mxu0 %v726
      %v1443 = vpop.f32.mrb[0].mxu0
      %v1444 = vadd.f32 %v908, %v1443
      %v1445 = vpop.f32.mrb[0].mxu0
      %v1446 = vpop.f32.mrb[0].mxu0
      %v1447 = vpop.f32.mrb[0].mxu0
      %1448 = vdwg.mxu0
      %v1465 = vunpack.c.l.b16 %v830
      %v1466 = vunpack.c.l.b16 %v831
      %v1467 = vunpack.c.l.b16 %v832
      %v1468 = vunpack.c.l.b16 %v833
      %v1469 = vunpack.c.l.b16 %v834
      %v1470 = vunpack.c.l.b16 %v835
      %v1471 = vunpack.c.l.b16 %v836
      %v1472 = vunpack.c.l.b16 %v837
      %v1473 = vunpack.c.l.b16 %v838
      %v1474 = vunpack.c.l.b16 %v839
      %v1475 = vunpack.c.l.b16 %v840
      %v1476 = vunpack.c.l.b16 %v841
      %v1477 = vunpack.c.l.b16 %v842
      %v1478 = vunpack.c.l.b16 %v843
      %v1479 = vunpack.c.l.b16 %v844
      %v1480 = vunpack.c.l.b16 %v845
      %v1481 = vpack.c.b16 %v1466, %v1465
      %v1482 = vpack.c.b16 %v1468, %v1467
      %v1483 = vpack.c.b16 %v1470, %v1469
      %v1484 = vpack.c.b16 %v1472, %v1471
      %v1485 = vpack.c.b16 %v1474, %v1473
      %v1486 = vpack.c.b16 %v1476, %v1475
      %v1487 = vpack.c.b16 %v1478, %v1477
      %v1488 = vpack.c.b16 %v1480, %v1479
      %1497 = vmatprep.subr.bf16.mxu0 0
      %1498 = vmatpush1.bf16.msra.mxu0 %v1481
      %1499 = vmatprep.subr.bf16.mxu0 0
      %1500 = vmatpush1.bf16.msra.mxu0 %v1482
      %1501 = vmatprep.subr.bf16.mxu0 0
      %1502 = vmatpush1.bf16.msra.mxu0 %v1483
      %1503 = vmatprep.subr.bf16.mxu0 0
      %1504 = vmatpush1.bf16.msra.mxu0 %v1484
      %1505 = vmatprep.subr.bf16.mxu0 0
      %1506 = vmatpush1.bf16.msra.mxu0 %v1485
      %1507 = vmatprep.subr.bf16.mxu0 0
      %1508 = vmatpush1.bf16.msra.mxu0 %v1486
      %1509 = vmatprep.subr.bf16.mxu0 0
      %1510 = vmatpush1.bf16.msra.mxu0 %v1487
      %1511 = vmatprep.subr.bf16.mxu0 0
      %1512 = vmatpush1.bf16.msra.mxu0 %v1488
      %1513 = vmatprep.subr.bf16.mxu0 0
      %1514 = vmatpush1.bf16.msra.mxu0 0
      %1515 = vmatprep.subr.bf16.mxu0 0
      %1516 = vmatpush1.bf16.msra.mxu0 0
      %1517 = vmatprep.subr.bf16.mxu0 0
      %1518 = vmatpush1.bf16.msra.mxu0 0
      %1519 = vmatprep.subr.bf16.mxu0 0
      %1520 = vmatpush1.bf16.msra.mxu0 0
      %1521 = vmatprep.subr.bf16.mxu0 0
      %1522 = vmatpush1.bf16.msra.mxu0 0
      %1523 = vmatprep.subr.bf16.mxu0 0
      %1524 = vmatpush1.bf16.msra.mxu0 0
      %1525 = vmatprep.subr.bf16.mxu0 0
      %1526 = vmatpush1.bf16.msra.mxu0 0
      %1527 = vmatprep.subr.bf16.mxu0 0
      %1528 = vmatpush1.bf16.msra.mxu0 0
      %1529 = vmatprep.mubr.bf16.mxu0 0
      %1530 = vmatmul.mubr.bf16.gmra.mrb[0].mxu0 %v729
      %v1531 = vpop.f32.mrb[0].mxu0
      %v1532 = vadd.f32 %v910, %v1531
      %v1533 = vpop.f32.mrb[0].mxu0
      %v1534 = vpop.f32.mrb[0].mxu0
      %v1535 = vpop.f32.mrb[0].mxu0
      %1536 = vdwg.mxu0
      %v1553 = vunpack.c.l.b16 %v846
      %v1554 = vunpack.c.l.b16 %v847
      %v1555 = vunpack.c.l.b16 %v848
      %v1556 = vunpack.c.l.b16 %v849
      %v1557 = vunpack.c.l.b16 %v850
      %v1558 = vunpack.c.l.b16 %v851
      %v1559 = vunpack.c.l.b16 %v852
      %v1560 = vunpack.c.l.b16 %v853
      %v1561 = vunpack.c.l.b16 %v854
      %v1562 = vunpack.c.l.b16 %v855
      %v1563 = vunpack.c.l.b16 %v856
      %v1564 = vunpack.c.l.b16 %v857
      %v1565 = vunpack.c.l.b16 %v858
      %v1566 = vunpack.c.l.b16 %v859
      %v1567 = vunpack.c.l.b16 %v860
      %v1568 = vunpack.c.l.b16 %v861
      %v1569 = vpack.c.b16 %v1554, %v1553
      %v1570 = vpack.c.b16 %v1556, %v1555
      %v1571 = vpack.c.b16 %v1558, %v1557
      %v1572 = vpack.c.b16 %v1560, %v1559
      %v1573 = vpack.c.b16 %v1562, %v1561
      %v1574 = vpack.c.b16 %v1564, %v1563
      %v1575 = vpack.c.b16 %v1566, %v1565
      %v1576 = vpack.c.b16 %v1568, %v1567
      %1585 = vmatprep.subr.bf16.mxu0 0
      %1586 = vmatpush1.bf16.msra.mxu0 %v1569
      %1587 = vmatprep.subr.bf16.mxu0 0
      %1588 = vmatpush1.bf16.msra.mxu0 %v1570
      %1589 = vmatprep.subr.bf16.mxu0 0
      %1590 = vmatpush1.bf16.msra.mxu0 %v1571
      %1591 = vmatprep.subr.bf16.mxu0 0
      %1592 = vmatpush1.bf16.msra.mxu0 %v1572
      %1593 = vmatprep.subr.bf16.mxu0 0
      %1594 = vmatpush1.bf16.msra.mxu0 %v1573
      %1595 = vmatprep.subr.bf16.mxu0 0
      %1596 = vmatpush1.bf16.msra.mxu0 %v1574
      %1597 = vmatprep.subr.bf16.mxu0 0
      %1598 = vmatpush1.bf16.msra.mxu0 %v1575
      %1599 = vmatprep.subr.bf16.mxu0 0
      %1600 = vmatpush1.bf16.msra.mxu0 %v1576
      %1601 = vmatprep.subr.bf16.mxu0 0
      %1602 = vmatpush1.bf16.msra.mxu0 0
      %1603 = vmatprep.subr.bf16.mxu0 0
      %1604 = vmatpush1.bf16.msra.mxu0 0
      %1605 = vmatprep.subr.bf16.mxu0 0
      %1606 = vmatpush1.bf16.msra.mxu0 0
      %1607 = vmatprep.subr.bf16.mxu0 0
      %1608 = vmatpush1.bf16.msra.mxu0 0
      %1609 = vmatprep.subr.bf16.mxu0 0
      %1610 = vmatpush1.bf16.msra.mxu0 0
      %1611 = vmatprep.subr.bf16.mxu0 0
      %1612 = vmatpush1.bf16.msra.mxu0 0
      %1613 = vmatprep.subr.bf16.mxu0 0
      %1614 = vmatpush1.bf16.msra.mxu0 0
      %1615 = vmatprep.subr.bf16.mxu0 0
      %1616 = vmatpush1.bf16.msra.mxu0 0
      %1617 = vmatprep.mubr.bf16.mxu0 0
      %1618 = vmatmul.mubr.bf16.gmra.mrb[0].mxu0 %v732
      %v1619 = vpop.f32.mrb[0].mxu0
      %v1620 = vadd.f32 %v912, %v1619
      %v1621 = vpop.f32.mrb[0].mxu0
      %v1622 = vpop.f32.mrb[0].mxu0
      %v1623 = vpop.f32.mrb[0].mxu0
      %1624 = vdwg.mxu0
      %v1625 = vpack.c.bf16 %v1004, %v1004
      %v1626 = vpack.c.bf16 %v1092, %v1092
      %v1627 = vpack.c.bf16 %v1180, %v1180
      %v1628 = vpack.c.bf16 %v1268, %v1268
      %v1629 = vpack.c.bf16 %v1356, %v1356
      %v1630 = vpack.c.bf16 %v1444, %v1444
      %v1631 = vpack.c.bf16 %v1532, %v1532
      %v1632 = vpack.c.bf16 %v1620, %v1620
      %v1633 = vcombine.low %v1625, %v1629
      %v1635 = vunpack.c.l.s4 1983009808
      %v1636 = vunpack.c.0.s8 %v1635
      %v1637 = vlaneseq
      %v1638 = vshrl.u32 %v1637, 7
      %v1639 = vsub.s32 %v1636, %v1638
      %v1640 = vrot.slane %v1633, %v1639
      %v1641 = vcombine.low %v1627, %v1631
      %v1643 = vunpack.c.l.s4 1983009808
      %v1644 = vunpack.c.0.s8 %v1643
      %v1645 = vlaneseq
      %v1646 = vshrl.u32 %v1645, 7
      %v1647 = vsub.s32 %v1644, %v1646
      %v1648 = vrot.slane %v1641, %v1647
      %v1649 = vcombine.low %v1640, %v1648
      %v1651 = vunpack.c.l.s4 1934713408
      %v1652 = vunpack.c.0.s8 %v1651
      %v1653 = vlaneseq
      %v1654 = vshrl.u32 %v1653, 7
      %v1655 = vsub.s32 %v1652, %v1654
      %v1656 = vrot.slane %v1649, %v1655
      %v1657 = vcombine.low %v1626, %v1630
      %v1659 = vunpack.c.l.s4 1983009808
      %v1660 = vunpack.c.0.s8 %v1659
      %v1661 = vlaneseq
      %v1662 = vshrl.u32 %v1661, 7
      %v1663 = vsub.s32 %v1660, %v1662
      %v1664 = vrot.slane %v1657, %v1663
      %v1665 = vcombine.low %v1628, %v1632
      %v1667 = vunpack.c.l.s4 1983009808
      %v1668 = vunpack.c.0.s8 %v1667
      %v1669 = vlaneseq
      %v1670 = vshrl.u32 %v1669, 7
      %v1671 = vsub.s32 %v1668, %v1670
      %v1672 = vrot.slane %v1665, %v1671
      %v1673 = vcombine.low %v1664, %v1672
      %v1675 = vunpack.c.l.s4 1934713408
      %v1676 = vunpack.c.0.s8 %v1675
      %v1677 = vlaneseq
      %v1678 = vshrl.u32 %v1677, 7
      %v1679 = vsub.s32 %v1676, %v1678
      %v1680 = vrot.slane %v1673, %v1679
      %v1683 = vpack.i.b16 %v1680, %v1656
      %v1685 = vsel %vm466, %v1683, 0
      %v1688 = vsel %vm466, %v230, 0
      %1690 = vmatprep.subr.bf16.mxu0 0
      %1691 = vmatpush1.bf16.xpose.msra.mxu0 %v1688
      %1692 = vmatprep.subr.bf16.mxu0 0
      %1693 = vmatpush1.bf16.xpose.msra.mxu0 0
      %1694 = vmatprep.subr.bf16.mxu0 0
      %1695 = vmatpush1.bf16.xpose.msra.mxu0 0
      %1696 = vmatprep.subr.bf16.mxu0 0
      %1697 = vmatpush1.bf16.xpose.msra.mxu0 0
      %1698 = vmatprep.subr.bf16.mxu0 0
      %1699 = vmatpush1.bf16.xpose.msra.mxu0 0
      %1700 = vmatprep.subr.bf16.mxu0 0
      %1701 = vmatpush1.bf16.xpose.msra.mxu0 0
      %1702 = vmatprep.subr.bf16.mxu0 0
      %1703 = vmatpush1.bf16.xpose.msra.mxu0 0
      %1704 = vmatprep.subr.bf16.mxu0 0
      %1705 = vmatpush1.bf16.xpose.msra.mxu0 0
      %1706 = vmatprep.subr.bf16.mxu0 0
      %1707 = vmatpush1.bf16.xpose.msra.mxu0 0
      %1708 = vmatprep.subr.bf16.mxu0 0
      %1709 = vmatpush1.bf16.xpose.msra.mxu0 0
      %1710 = vmatprep.subr.bf16.mxu0 0
      %1711 = vmatpush1.bf16.xpose.msra.mxu0 0
      %1712 = vmatprep.subr.bf16.mxu0 0
      %1713 = vmatpush1.bf16.xpose.msra.mxu0 0
      %1714 = vmatprep.subr.bf16.mxu0 0
      %1715 = vmatpush1.bf16.xpose.msra.mxu0 0
      %1716 = vmatprep.subr.bf16.mxu0 0
      %1717 = vmatpush1.bf16.xpose.msra.mxu0 0
      %1718 = vmatprep.subr.bf16.mxu0 0
      %1719 = vmatpush1.bf16.xpose.msra.mxu0 0
      %1720 = vmatprep.subr.bf16.mxu0 0
      %1721 = vmatpush1.bf16.xpose.msra.mxu0 0
      %1722 = vmatprep.mubr.bf16.mxu0 0
      %1723 = vmatmul.mubr.bf16.gmra.mrb[0].mxu0 %v1685
      %v1724 = vpop.f32.mrb[0].mxu0
      %v1725 = vadd.f32 0.0, %v1724
      %v1726 = vpop.f32.mrb[0].mxu0
      %v1727 = vpop.f32.mrb[0].mxu0
      %v1728 = vpop.f32.mrb[0].mxu0
      %1729 = vdwg.mxu0
      %v1730 = vmul.f32 %v1725, %v1725
      %vm1731 = vcmask 31744
      %v1732 = vsel %vm1731, %v1730, 0.0
      %1733 = vadd.xlane.f32.xlu0 %v1732
      %v1734 = vpop.xlane.xlu0 %1733
      %v1735 = vrot.slane %v1734, 4
      %v1736 = vadd.f32 %v1734, %v1735
      %v1737 = vrot.slane %v1736, 2
      %v1738 = vadd.f32 %v1736, %v1737
      %v1739 = vrot.slane %v1738, 1
      %v1740 = vadd.f32 %v1738, %v1739
      %v1741 = vmax.f32 %v1740, 1e-24
      %v1742 = vrsqrt.pop %v1741
      %v1743 = vmul.f32 %v1725, %v1742
      %1744 = vst.msk [vmem:[%s219] sm:$0xff] %vm1731, %v1743
      %p1745 = scmp.lt.s32.totalorder %s16, 1
      %s1746 = scalar_select %p1745, %s16, 1
      %s1747 = smul.addr %s1746, 8
      %s1748 = scalar_lea.vmem %s5, %s1747
      // Predicated region
      $region41: #{tpu_custom_call.1} parent=39 // pred_check
        %p1749 = pneg %p144
      $region42: #{tpu_custom_call.1} parent=39 // pred_check_branch
        %1751 = sbr.rel (%p1749) target = $region44
      $region43: #{tpu_custom_call.1} parent=39 // pred_region
        _
      $region44: #{tpu_custom_call.1} parent=39 // pred_fallthru
        _
    $region40: #{tpu_custom_call.1} parent=5 // pred_fallthru
      _
    %p1752 = scmp.le.s32.totalorder 2, %s11
    // Predicated region
    $region45: #{tpu_custom_call.1} parent=5 // pred_check
      %p1753 = pneg %p1752
    $region46: #{tpu_custom_call.1} parent=5 // pred_check_branch
      %1755 = sbr.rel (%p1753) target = $region48
    $region47: #{tpu_custom_call.1} parent=5 // pred_region
      %s1756 = ssub.s32 %s11, 2
      // Predicated region
      $region49: #{tpu_custom_call.1} parent=47 // pred_check
        %p1757 = pneg %p150
      $region50: #{tpu_custom_call.1} parent=47 // pred_check_branch
        %1759 = sbr.rel (%p1757) target = $region52
      $region51: #{tpu_custom_call.1} parent=47 // pred_region
        %p1760 = scmp.lt.s32.totalorder %s17, 1
        %s1761 = scalar_select %p1760, %s17, 1
        %s1762 = smul.addr %s1761, 8
        %s1763 = scalar_lea.vmem %s5, %s1762
      $region52: #{tpu_custom_call.1} parent=47 // pred_fallthru
        _
    $region48: #{tpu_custom_call.1} parent=5 // pred_fallthru
      _
  $region6: #{tpu_custom_call.1} parent=0 // loop_footer
    %s15 = sadd.s32 1, %s11
  $region7: #{tpu_custom_call.1} parent=0 // loop_footer_branch
    %10 = sbr.rel target = $region3
  $region8: #{tpu_custom_call.1} parent=0 // loop_exit
    _

</llo_original>
